<compile_context>
chip_gen: v6e
topology: v6e:2x2x1
jax: 0.10.0
libtpu: 0.0.40
codegen_flags: <defaults>
</compile_context>

<pallas_src>
import functools

import jax
import jax.numpy as jnp
from jax.experimental import pallas as pl
from jax.experimental.pallas import tpu as pltpu

_LANES = 128  # pad all channel dims to one full lane width


# ----------------------------------------------------------------------------
# Fused Pallas kernel: all GINEConv layers + post Linear + tanh
# ----------------------------------------------------------------------------
def _gine_encoder_kernel(num_edges, mlp_counts, eps, *refs):
    """refs = (src, dst, x, edge_w_feat,
               [edge_W, edge_b, (W, b)*mlp_counts[c]] per conv, post_W, post_b,
               out, h_scratch, msg_scratch, agg_scratch)
    All feature refs are lane-padded to 128 channels.
    """
    src_ref, dst_ref, x_ref, ew_ref = refs[:4]
    num_w = sum(2 + 2 * c for c in mlp_counts) + 2
    w_refs = refs[4:4 + num_w]
    out_ref = refs[4 + num_w]
    h_ref, msg_ref, agg_ref = refs[4 + num_w + 1:]

    # node features live in VMEM scratch across all conv layers
    h_ref[...] = x_ref[...]
    msg_ref[...] = jnp.zeros_like(msg_ref)

    idx = 0
    for n_mlp in mlp_counts:
        # ---- edge embedding: Linear(edge_dim -> C) ----------------------
        edge_w = w_refs[idx][...]
        edge_b = w_refs[idx + 1][...]
        idx += 2
        edge_emb = (
            jnp.dot(ew_ref[...], edge_w, preferred_element_type=jnp.float32)
            + edge_b
        )                                                       # [Ep, 128]

        # ---- gather source-node rows: msg[e] = h[src[e]] ----------------
        def gather_body(e, carry):
            s = src_ref[e]
            msg_ref[pl.ds(e, 1), :] = h_ref[pl.ds(s, 1), :]
            return carry

        jax.lax.fori_loop(0, num_edges, gather_body, 0)

        # ---- message: relu(x_j + edge_emb) -------------------------------
        msg_ref[...] = jnp.maximum(msg_ref[...] + edge_emb, 0.0)

        # ---- scatter-add (segment sum) to destination nodes --------------
        agg_ref[...] = jnp.zeros_like(agg_ref)

        def scatter_body(e, carry):
            d = dst_ref[e]
            agg_ref[pl.ds(d, 1), :] = (
                agg_ref[pl.ds(d, 1), :] + msg_ref[pl.ds(e, 1), :]
            )
            return carry

        jax.lax.fori_loop(0, num_edges, scatter_body, 0)

        # ---- (1+eps)*h + agg, then the conv's MLP (Linear + ReLU)* -------
        h = h_ref[...]
        z = h + agg_ref[...]
        if eps != 0.0:          # statically skipped for default eps == 0
            z = z + eps * h
        for _ in range(n_mlp):
            w = w_refs[idx][...]
            b = w_refs[idx + 1][...]
            idx += 2
            z = jnp.maximum(
                jnp.dot(z, w, preferred_element_type=jnp.float32) + b, 0.0
            )
        h_ref[...] = z

    # ---- post Linear + tanh (lane-dense [N, 128] store) ------------------
    post_w = w_refs[idx][...]
    post_b = w_refs[idx + 1][...]
    out = jnp.tanh(
        jnp.dot(h_ref[...], post_w, preferred_element_type=jnp.float32) + post_b
    )
    out_ref[...] = out.astype(out_ref.dtype)


# ----------------------------------------------------------------------------
# Wrapper
# ----------------------------------------------------------------------------
def _round_up(v, m):
    return ((v + m - 1) // m) * m


def _pad_to(a, rows, cols):
    a = a.astype(jnp.float32)
    return jnp.pad(a, ((0, rows - a.shape[0]), (0, cols - a.shape[1])))


def gine_encoder_forward(params, x, edge_index, edge_weight):
    n_nodes, _ = x.shape
    n_edges = edge_weight.shape[0]
    out_ch = params["post_w"].shape[1]

    n_pad = _round_up(max(n_nodes, 8), 8)
    e_pad = _round_up(max(n_edges, 8), 8)
    P = _LANES

    x_p = _pad_to(x, n_pad, P)
    ew_p = _pad_to(edge_weight, e_pad, P)
    src = edge_index[0].astype(jnp.int32)
    dst = edge_index[1].astype(jnp.int32)

    # flatten + lane-pad every Linear (exact: zero pads stay zero end-to-end)
    flat_w = []
    mlp_counts = []
    for conv in params["convs"]:
        flat_w.append(_pad_to(conv["edge_w"], P, P))
        flat_w.append(_pad_to(conv["edge_b"], 1, P))
        mlp_counts.append(len(conv["mlp"]))
        for (w, b) in conv["mlp"]:
            flat_w.append(_pad_to(w, P, P))
            flat_w.append(_pad_to(b, 1, P))
    flat_w.append(_pad_to(params["post_w"], P, P))
    flat_w.append(_pad_to(params["post_b"], 1, P))
    mlp_counts = tuple(mlp_counts)

    kernel = functools.partial(_gine_encoder_kernel, n_edges, mlp_counts, 0.0)

    def full_spec(shape):
        # whole (small, lane-padded) array resident in VMEM; block == array
        return pl.BlockSpec(shape, lambda i, src, dst: (0,) * len(shape))

    in_specs = [full_spec(x_p.shape), full_spec(ew_p.shape)] + [
        full_spec(w.shape) for w in flat_w
    ]

    out_p = pl.pallas_call(
        kernel,
        out_shape=jax.ShapeDtypeStruct((n_pad, P), jnp.float32),
        grid_spec=pltpu.PrefetchScalarGridSpec(
            num_scalar_prefetch=2,          # src, dst -> SMEM index tables
            grid=(1,),
            in_specs=in_specs,
            out_specs=full_spec((n_pad, P)),
            scratch_shapes=[
                pltpu.VMEM((n_pad, P), jnp.float32),   # h   (resident features)
                pltpu.VMEM((e_pad, P), jnp.float32),   # msg (gather / messages)
                pltpu.VMEM((n_pad, P), jnp.float32),   # agg (segment sum)
            ],
        ),
        compiler_params=pltpu.CompilerParams(
            dimension_semantics=("arbitrary",),
        ),
    )(src, dst, x_p, ew_p, *flat_w)

    return out_p[:n_nodes, :out_ch]


# ----------------------------------------------------------------------------
# Parameter init (mirrors torch.nn.Linear shapes, deterministic)
# ----------------------------------------------------------------------------
def _init_linear(key, fan_in, fan_out):
    kw, kb = jax.random.split(key)
    bound = 1.0 / jnp.sqrt(jnp.float32(fan_in))
    w = jax.random.uniform(kw, (fan_in, fan_out), jnp.float32, -bound, bound)
    b = jax.random.uniform(kb, (1, fan_out), jnp.float32, -bound, bound)
    return w, b


def init_gine_encoder_params(key, in_channels, edge_dim, gine_mlp_channels, out_channels):
    params = {"convs": []}
    for mlp_channels in gine_mlp_channels:
        key, ke = jax.random.split(key)
        ew, eb = _init_linear(ke, edge_dim, mlp_channels[0])
        mlp = []
        for i in range(len(mlp_channels) - 1):
            key, kl = jax.random.split(key)
            mlp.append(_init_linear(kl, mlp_channels[i], mlp_channels[i + 1]))
        params["convs"].append({"edge_w": ew, "edge_b": eb, "mlp": mlp})
    key, kp = jax.random.split(key)
    pw, pb = _init_linear(kp, gine_mlp_channels[-1][-1], out_channels)
    params["post_w"] = pw
    params["post_b"] = pb
    return params


# ----------------------------------------------------------------------------
# Pure-JAX reference (same math, no Pallas) for a sanity check
# ----------------------------------------------------------------------------
def _reference_forward(params, x, edge_index, edge_weight):
    n_nodes = x.shape[0]
    src, dst = edge_index[0], edge_index[1]
    h = x
    for conv in params["convs"]:
        edge_emb = edge_weight @ conv["edge_w"] + conv["edge_b"]
        msg = jax.nn.relu(h[src] + edge_emb)
        agg = jnp.zeros((n_nodes, msg.shape[1]), jnp.float32).at[dst].add(msg)
        z = h + agg                                   # eps == 0
        for (w, b) in conv["mlp"]:
            z = jax.nn.relu(z @ w + b)
        h = z
    return jnp.tanh(h @ params["post_w"] + params["post_b"])


# ----------------------------------------------------------------------------
if __name__ == "__main__":
    key = jax.random.PRNGKey(0)

    # small, module-consistent shapes
    num_nodes = 16
    num_edges = 48
    in_channels = 8
    edge_dim = 4
    gine_mlp_channels = [[in_channels, 32, 32], [32, 32, 32]]
    out_channels = 16

    k_par, k_x, k_src, k_dst, k_ew = jax.random.split(key, 5)
    params = init_gine_encoder_params(
        k_par, in_channels, edge_dim, gine_mlp_channels, out_channels
    )

    x = jax.random.normal(k_x, (num_nodes, in_channels), jnp.float32)
    edge_index = jnp.stack(
        [
            jax.random.randint(k_src, (num_edges,), 0, num_nodes),
            jax.random.randint(k_dst, (num_edges,), 0, num_nodes),
        ],
        axis=0,
    ).astype(jnp.int32)
    edge_weight = jax.random.normal(k_ew, (num_edges, edge_dim), jnp.float32)

    out = gine_encoder_forward(params, x, edge_index, edge_weight)
    out = jax.block_until_ready(out)

    ref = _reference_forward(params, x, edge_index, edge_weight)
    assert out.shape == (num_nodes, out_channels)
    assert jnp.allclose(out, ref, atol=1e-4, rtol=1e-4)

    print("KERNEL_OK")
</pallas_src>

<mosaic_0001>
module attributes {stable_mosaic.version = 11 : i64} {
  func.func @_gine_encoder_kernel(%arg0: i32, %arg1: memref<48xi32, #tpu.memory_space<smem>>, %arg2: memref<48xi32, #tpu.memory_space<smem>>, %arg3: memref<16x128xf32, #tpu.memory_space<vmem>>, %arg4: memref<48x128xf32, #tpu.memory_space<vmem>>, %arg5: memref<128x128xf32, #tpu.memory_space<vmem>>, %arg6: memref<1x128xf32, #tpu.memory_space<vmem>>, %arg7: memref<128x128xf32, #tpu.memory_space<vmem>>, %arg8: memref<1x128xf32, #tpu.memory_space<vmem>>, %arg9: memref<128x128xf32, #tpu.memory_space<vmem>>, %arg10: memref<1x128xf32, #tpu.memory_space<vmem>>, %arg11: memref<128x128xf32, #tpu.memory_space<vmem>>, %arg12: memref<1x128xf32, #tpu.memory_space<vmem>>, %arg13: memref<128x128xf32, #tpu.memory_space<vmem>>, %arg14: memref<1x128xf32, #tpu.memory_space<vmem>>, %arg15: memref<128x128xf32, #tpu.memory_space<vmem>>, %arg16: memref<1x128xf32, #tpu.memory_space<vmem>>, %arg17: memref<128x128xf32, #tpu.memory_space<vmem>>, %arg18: memref<1x128xf32, #tpu.memory_space<vmem>>, %arg19: memref<16x128xf32, #tpu.memory_space<vmem>>, %arg20: memref<16x128xf32, #tpu.memory_space<vmem>>, %arg21: memref<48x128xf32, #tpu.memory_space<vmem>>, %arg22: memref<16x128xf32, #tpu.memory_space<vmem>>) attributes {dimension_semantics = [#tpu.dimension_semantics<arbitrary>], iteration_bounds = array<i64: 1>, scalar_prefetch = 2 : i64, scratch_operands = 3 : i64, tpu.core_type = #tpu.core_type<tc>, window_params = [{pipeline_mode = #tpu.pipeline_mode<synchronous>, transform_indices = @transform_0, window_bounds = array<i64: 16, 128>}, {pipeline_mode = #tpu.pipeline_mode<synchronous>, transform_indices = @transform_1, window_bounds = array<i64: 48, 128>}, {pipeline_mode = #tpu.pipeline_mode<synchronous>, transform_indices = @transform_2, window_bounds = array<i64: 128, 128>}, {pipeline_mode = #tpu.pipeline_mode<synchronous>, transform_indices = @transform_3, window_bounds = array<i64: 1, 128>}, {pipeline_mode = #tpu.pipeline_mode<synchronous>, transform_indices = @transform_4, window_bounds = array<i64: 128, 128>}, {pipeline_mode = #tpu.pipeline_mode<synchronous>, transform_indices = @transform_5, window_bounds = array<i64: 1, 128>}, {pipeline_mode = #tpu.pipeline_mode<synchronous>, transform_indices = @transform_6, window_bounds = array<i64: 128, 128>}, {pipeline_mode = #tpu.pipeline_mode<synchronous>, transform_indices = @transform_7, window_bounds = array<i64: 1, 128>}, {pipeline_mode = #tpu.pipeline_mode<synchronous>, transform_indices = @transform_8, window_bounds = array<i64: 128, 128>}, {pipeline_mode = #tpu.pipeline_mode<synchronous>, transform_indices = @transform_9, window_bounds = array<i64: 1, 128>}, {pipeline_mode = #tpu.pipeline_mode<synchronous>, transform_indices = @transform_10, window_bounds = array<i64: 128, 128>}, {pipeline_mode = #tpu.pipeline_mode<synchronous>, transform_indices = @transform_11, window_bounds = array<i64: 1, 128>}, {pipeline_mode = #tpu.pipeline_mode<synchronous>, transform_indices = @transform_12, window_bounds = array<i64: 128, 128>}, {pipeline_mode = #tpu.pipeline_mode<synchronous>, transform_indices = @transform_13, window_bounds = array<i64: 1, 128>}, {pipeline_mode = #tpu.pipeline_mode<synchronous>, transform_indices = @transform_14, window_bounds = array<i64: 128, 128>}, {pipeline_mode = #tpu.pipeline_mode<synchronous>, transform_indices = @transform_15, window_bounds = array<i64: 1, 128>}, {pipeline_mode = #tpu.pipeline_mode<synchronous>, transform_indices = @transform_16, window_bounds = array<i64: 16, 128>}]} {
    %c0 = arith.constant 0 : index
    %c0_0 = arith.constant 0 : index
    %0 = vector.load %arg3[%c0, %c0_0] : memref<16x128xf32, #tpu.memory_space<vmem>>, vector<16x128xf32>
    %c0_1 = arith.constant 0 : index
    %c0_2 = arith.constant 0 : index
    %1 = vector.load %arg20[%c0_1, %c0_2] : memref<16x128xf32, #tpu.memory_space<vmem>>, vector<16x128xf32>
    tpu.vector_store %arg20[%c0_1, %c0_2], %0 {strides = array<i32>} : memref<16x128xf32, #tpu.memory_space<vmem>>, vector<16x128xf32>,
    %cst = arith.constant 0.000000e+00 : f32
    %2 = vector.broadcast %cst : f32 to vector<48x128xf32>
    %c0_3 = arith.constant 0 : index
    %c0_4 = arith.constant 0 : index
    %3 = vector.load %arg21[%c0_3, %c0_4] : memref<48x128xf32, #tpu.memory_space<vmem>>, vector<48x128xf32>
    tpu.vector_store %arg21[%c0_3, %c0_4], %2 {strides = array<i32>} : memref<48x128xf32, #tpu.memory_space<vmem>>, vector<48x128xf32>,
    %c0_5 = arith.constant 0 : index
    %c0_6 = arith.constant 0 : index
    %4 = vector.load %arg5[%c0_5, %c0_6] : memref<128x128xf32, #tpu.memory_space<vmem>>, vector<128x128xf32>
    %c0_7 = arith.constant 0 : index
    %c0_8 = arith.constant 0 : index
    %5 = vector.load %arg6[%c0_7, %c0_8] : memref<1x128xf32, #tpu.memory_space<vmem>>, vector<1x128xf32>
    %c0_9 = arith.constant 0 : index
    %c0_10 = arith.constant 0 : index
    %6 = vector.load %arg4[%c0_9, %c0_10] : memref<48x128xf32, #tpu.memory_space<vmem>>, vector<48x128xf32>
    %cst_11 = arith.constant dense<0.000000e+00> : vector<48x128xf32>
    %7 = tpu.matmul %6, %4, %cst_11 {dimension_numbers = #tpu.dot_dimension_numbers<[1], [0], [0], [1], [0, 0, 1, 1], [], []>} : vector<48x128xf32>, vector<128x128xf32>, vector<48x128xf32> -> vector<48x128xf32>
    %8 = vector.broadcast %5 : vector<1x128xf32> to vector<48x128xf32>
    %9 = arith.addf %7, %8 : vector<48x128xf32>
    %c0_i32 = arith.constant 0 : i32
    %c48_i32 = arith.constant 48 : i32
    %10 = arith.addi %c0_i32, %c48_i32 : i32
    %c1_i32 = arith.constant 1 : i32
    scf.for %arg23 = %c0_i32 to %10 step %c1_i32  : i32 {
      %78 = arith.index_cast %arg23 : i32 to index
      %79 = memref.load %arg1[%78] : memref<48xi32, #tpu.memory_space<smem>>
      %80 = arith.index_cast %79 : i32 to index
      %c0_93 = arith.constant 0 : index
      %81 = vector.load %arg20[%80, %c0_93] : memref<16x128xf32, #tpu.memory_space<vmem>>, vector<1x128xf32>
      %82 = arith.index_cast %arg23 : i32 to index
      %c0_94 = arith.constant 0 : index
      %83 = vector.load %arg21[%82, %c0_94] : memref<48x128xf32, #tpu.memory_space<vmem>>, vector<1x128xf32>
      tpu.vector_store %arg21[%82, %c0_94], %81 {strides = array<i32>} : memref<48x128xf32, #tpu.memory_space<vmem>>, vector<1x128xf32>,
    }
    %c48_i32_12 = arith.constant 48 : i32
    %c0_13 = arith.constant 0 : index
    %c0_14 = arith.constant 0 : index
    %11 = vector.load %arg21[%c0_13, %c0_14] : memref<48x128xf32, #tpu.memory_space<vmem>>, vector<48x128xf32>
    %12 = arith.addf %11, %9 : vector<48x128xf32>
    %cst_15 = arith.constant 0.000000e+00 : f32
    %13 = vector.broadcast %cst_15 : f32 to vector<48x128xf32>
    %14 = arith.maximumf %12, %13 : vector<48x128xf32>
    %c0_16 = arith.constant 0 : index
    %c0_17 = arith.constant 0 : index
    %15 = vector.load %arg21[%c0_16, %c0_17] : memref<48x128xf32, #tpu.memory_space<vmem>>, vector<48x128xf32>
    tpu.vector_store %arg21[%c0_16, %c0_17], %14 {strides = array<i32>} : memref<48x128xf32, #tpu.memory_space<vmem>>, vector<48x128xf32>,
    %cst_18 = arith.constant 0.000000e+00 : f32
    %16 = vector.broadcast %cst_18 : f32 to vector<16x128xf32>
    %c0_19 = arith.constant 0 : index
    %c0_20 = arith.constant 0 : index
    %17 = vector.load %arg22[%c0_19, %c0_20] : memref<16x128xf32, #tpu.memory_space<vmem>>, vector<16x128xf32>
    tpu.vector_store %arg22[%c0_19, %c0_20], %16 {strides = array<i32>} : memref<16x128xf32, #tpu.memory_space<vmem>>, vector<16x128xf32>,
    %c0_i32_21 = arith.constant 0 : i32
    %c48_i32_22 = arith.constant 48 : i32
    %18 = arith.addi %c0_i32_21, %c48_i32_22 : i32
    %c1_i32_23 = arith.constant 1 : i32
    scf.for %arg23 = %c0_i32_21 to %18 step %c1_i32_23  : i32 {
      %78 = arith.index_cast %arg23 : i32 to index
      %79 = memref.load %arg2[%78] : memref<48xi32, #tpu.memory_space<smem>>
      %80 = arith.index_cast %79 : i32 to index
      %c0_93 = arith.constant 0 : index
      %81 = vector.load %arg22[%80, %c0_93] : memref<16x128xf32, #tpu.memory_space<vmem>>, vector<1x128xf32>
      %82 = arith.index_cast %arg23 : i32 to index
      %c0_94 = arith.constant 0 : index
      %83 = vector.load %arg21[%82, %c0_94] : memref<48x128xf32, #tpu.memory_space<vmem>>, vector<1x128xf32>
      %84 = arith.addf %81, %83 : vector<1x128xf32>
      %85 = arith.index_cast %79 : i32 to index
      %c0_95 = arith.constant 0 : index
      %86 = vector.load %arg22[%85, %c0_95] : memref<16x128xf32, #tpu.memory_space<vmem>>, vector<1x128xf32>
      tpu.vector_store %arg22[%85, %c0_95], %84 {strides = array<i32>} : memref<16x128xf32, #tpu.memory_space<vmem>>, vector<1x128xf32>,
    }
    %c48_i32_24 = arith.constant 48 : i32
    %c0_25 = arith.constant 0 : index
    %c0_26 = arith.constant 0 : index
    %19 = vector.load %arg20[%c0_25, %c0_26] : memref<16x128xf32, #tpu.memory_space<vmem>>, vector<16x128xf32>
    %c0_27 = arith.constant 0 : index
    %c0_28 = arith.constant 0 : index
    %20 = vector.load %arg22[%c0_27, %c0_28] : memref<16x128xf32, #tpu.memory_space<vmem>>, vector<16x128xf32>
    %21 = arith.addf %19, %20 : vector<16x128xf32>
    %c0_29 = arith.constant 0 : index
    %c0_30 = arith.constant 0 : index
    %22 = vector.load %arg7[%c0_29, %c0_30] : memref<128x128xf32, #tpu.memory_space<vmem>>, vector<128x128xf32>
    %c0_31 = arith.constant 0 : index
    %c0_32 = arith.constant 0 : index
    %23 = vector.load %arg8[%c0_31, %c0_32] : memref<1x128xf32, #tpu.memory_space<vmem>>, vector<1x128xf32>
    %cst_33 = arith.constant dense<0.000000e+00> : vector<16x128xf32>
    %24 = tpu.matmul %21, %22, %cst_33 {dimension_numbers = #tpu.dot_dimension_numbers<[1], [0], [0], [1], [0, 0, 1, 1], [], []>} : vector<16x128xf32>, vector<128x128xf32>, vector<16x128xf32> -> vector<16x128xf32>
    %25 = vector.broadcast %23 : vector<1x128xf32> to vector<16x128xf32>
    %26 = arith.addf %24, %25 : vector<16x128xf32>
    %cst_34 = arith.constant 0.000000e+00 : f32
    %27 = vector.broadcast %cst_34 : f32 to vector<16x128xf32>
    %28 = arith.maximumf %26, %27 : vector<16x128xf32>
    %c0_35 = arith.constant 0 : index
    %c0_36 = arith.constant 0 : index
    %29 = vector.load %arg9[%c0_35, %c0_36] : memref<128x128xf32, #tpu.memory_space<vmem>>, vector<128x128xf32>
    %c0_37 = arith.constant 0 : index
    %c0_38 = arith.constant 0 : index
    %30 = vector.load %arg10[%c0_37, %c0_38] : memref<1x128xf32, #tpu.memory_space<vmem>>, vector<1x128xf32>
    %cst_39 = arith.constant dense<0.000000e+00> : vector<16x128xf32>
    %31 = tpu.matmul %28, %29, %cst_39 {dimension_numbers = #tpu.dot_dimension_numbers<[1], [0], [0], [1], [0, 0, 1, 1], [], []>} : vector<16x128xf32>, vector<128x128xf32>, vector<16x128xf32> -> vector<16x128xf32>
    %32 = vector.broadcast %30 : vector<1x128xf32> to vector<16x128xf32>
    %33 = arith.addf %31, %32 : vector<16x128xf32>
    %cst_40 = arith.constant 0.000000e+00 : f32
    %34 = vector.broadcast %cst_40 : f32 to vector<16x128xf32>
    %35 = arith.maximumf %33, %34 : vector<16x128xf32>
    %c0_41 = arith.constant 0 : index
    %c0_42 = arith.constant 0 : index
    %36 = vector.load %arg20[%c0_41, %c0_42] : memref<16x128xf32, #tpu.memory_space<vmem>>, vector<16x128xf32>
    tpu.vector_store %arg20[%c0_41, %c0_42], %35 {strides = array<i32>} : memref<16x128xf32, #tpu.memory_space<vmem>>, vector<16x128xf32>,
    %c0_43 = arith.constant 0 : index
    %c0_44 = arith.constant 0 : index
    %37 = vector.load %arg11[%c0_43, %c0_44] : memref<128x128xf32, #tpu.memory_space<vmem>>, vector<128x128xf32>
    %c0_45 = arith.constant 0 : index
    %c0_46 = arith.constant 0 : index
    %38 = vector.load %arg12[%c0_45, %c0_46] : memref<1x128xf32, #tpu.memory_space<vmem>>, vector<1x128xf32>
    %c0_47 = arith.constant 0 : index
    %c0_48 = arith.constant 0 : index
    %39 = vector.load %arg4[%c0_47, %c0_48] : memref<48x128xf32, #tpu.memory_space<vmem>>, vector<48x128xf32>
    %cst_49 = arith.constant dense<0.000000e+00> : vector<48x128xf32>
    %40 = tpu.matmul %39, %37, %cst_49 {dimension_numbers = #tpu.dot_dimension_numbers<[1], [0], [0], [1], [0, 0, 1, 1], [], []>} : vector<48x128xf32>, vector<128x128xf32>, vector<48x128xf32> -> vector<48x128xf32>
    %41 = vector.broadcast %38 : vector<1x128xf32> to vector<48x128xf32>
    %42 = arith.addf %40, %41 : vector<48x128xf32>
    %c0_i32_50 = arith.constant 0 : i32
    %c48_i32_51 = arith.constant 48 : i32
    %43 = arith.addi %c0_i32_50, %c48_i32_51 : i32
    %c1_i32_52 = arith.constant 1 : i32
    scf.for %arg23 = %c0_i32_50 to %43 step %c1_i32_52  : i32 {
      %78 = arith.index_cast %arg23 : i32 to index
      %79 = memref.load %arg1[%78] : memref<48xi32, #tpu.memory_space<smem>>
      %80 = arith.index_cast %79 : i32 to index
      %c0_93 = arith.constant 0 : index
      %81 = vector.load %arg20[%80, %c0_93] : memref<16x128xf32, #tpu.memory_space<vmem>>, vector<1x128xf32>
      %82 = arith.index_cast %arg23 : i32 to index
      %c0_94 = arith.constant 0 : index
      %83 = vector.load %arg21[%82, %c0_94] : memref<48x128xf32, #tpu.memory_space<vmem>>, vector<1x128xf32>
      tpu.vector_store %arg21[%82, %c0_94], %81 {strides = array<i32>} : memref<48x128xf32, #tpu.memory_space<vmem>>, vector<1x128xf32>,
    }
    %c48_i32_53 = arith.constant 48 : i32
    %c0_54 = arith.constant 0 : index
    %c0_55 = arith.constant 0 : index
    %44 = vector.load %arg21[%c0_54, %c0_55] : memref<48x128xf32, #tpu.memory_space<vmem>>, vector<48x128xf32>
    %45 = arith.addf %44, %42 : vector<48x128xf32>
    %cst_56 = arith.constant 0.000000e+00 : f32
    %46 = vector.broadcast %cst_56 : f32 to vector<48x128xf32>
    %47 = arith.maximumf %45, %46 : vector<48x128xf32>
    %c0_57 = arith.constant 0 : index
    %c0_58 = arith.constant 0 : index
    %48 = vector.load %arg21[%c0_57, %c0_58] : memref<48x128xf32, #tpu.memory_space<vmem>>, vector<48x128xf32>
    tpu.vector_store %arg21[%c0_57, %c0_58], %47 {strides = array<i32>} : memref<48x128xf32, #tpu.memory_space<vmem>>, vector<48x128xf32>,
    %cst_59 = arith.constant 0.000000e+00 : f32
    %49 = vector.broadcast %cst_59 : f32 to vector<16x128xf32>
    %c0_60 = arith.constant 0 : index
    %c0_61 = arith.constant 0 : index
    %50 = vector.load %arg22[%c0_60, %c0_61] : memref<16x128xf32, #tpu.memory_space<vmem>>, vector<16x128xf32>
    tpu.vector_store %arg22[%c0_60, %c0_61], %49 {strides = array<i32>} : memref<16x128xf32, #tpu.memory_space<vmem>>, vector<16x128xf32>,
    %c0_i32_62 = arith.constant 0 : i32
    %c48_i32_63 = arith.constant 48 : i32
    %51 = arith.addi %c0_i32_62, %c48_i32_63 : i32
    %c1_i32_64 = arith.constant 1 : i32
    scf.for %arg23 = %c0_i32_62 to %51 step %c1_i32_64  : i32 {
      %78 = arith.index_cast %arg23 : i32 to index
      %79 = memref.load %arg2[%78] : memref<48xi32, #tpu.memory_space<smem>>
      %80 = arith.index_cast %79 : i32 to index
      %c0_93 = arith.constant 0 : index
      %81 = vector.load %arg22[%80, %c0_93] : memref<16x128xf32, #tpu.memory_space<vmem>>, vector<1x128xf32>
      %82 = arith.index_cast %arg23 : i32 to index
      %c0_94 = arith.constant 0 : index
      %83 = vector.load %arg21[%82, %c0_94] : memref<48x128xf32, #tpu.memory_space<vmem>>, vector<1x128xf32>
      %84 = arith.addf %81, %83 : vector<1x128xf32>
      %85 = arith.index_cast %79 : i32 to index
      %c0_95 = arith.constant 0 : index
      %86 = vector.load %arg22[%85, %c0_95] : memref<16x128xf32, #tpu.memory_space<vmem>>, vector<1x128xf32>
      tpu.vector_store %arg22[%85, %c0_95], %84 {strides = array<i32>} : memref<16x128xf32, #tpu.memory_space<vmem>>, vector<1x128xf32>,
    }
    %c48_i32_65 = arith.constant 48 : i32
    %c0_66 = arith.constant 0 : index
    %c0_67 = arith.constant 0 : index
    %52 = vector.load %arg20[%c0_66, %c0_67] : memref<16x128xf32, #tpu.memory_space<vmem>>, vector<16x128xf32>
    %c0_68 = arith.constant 0 : index
    %c0_69 = arith.constant 0 : index
    %53 = vector.load %arg22[%c0_68, %c0_69] : memref<16x128xf32, #tpu.memory_space<vmem>>, vector<16x128xf32>
    %54 = arith.addf %52, %53 : vector<16x128xf32>
    %c0_70 = arith.constant 0 : index
    %c0_71 = arith.constant 0 : index
    %55 = vector.load %arg13[%c0_70, %c0_71] : memref<128x128xf32, #tpu.memory_space<vmem>>, vector<128x128xf32>
    %c0_72 = arith.constant 0 : index
    %c0_73 = arith.constant 0 : index
    %56 = vector.load %arg14[%c0_72, %c0_73] : memref<1x128xf32, #tpu.memory_space<vmem>>, vector<1x128xf32>
    %cst_74 = arith.constant dense<0.000000e+00> : vector<16x128xf32>
    %57 = tpu.matmul %54, %55, %cst_74 {dimension_numbers = #tpu.dot_dimension_numbers<[1], [0], [0], [1], [0, 0, 1, 1], [], []>} : vector<16x128xf32>, vector<128x128xf32>, vector<16x128xf32> -> vector<16x128xf32>
    %58 = vector.broadcast %56 : vector<1x128xf32> to vector<16x128xf32>
    %59 = arith.addf %57, %58 : vector<16x128xf32>
    %cst_75 = arith.constant 0.000000e+00 : f32
    %60 = vector.broadcast %cst_75 : f32 to vector<16x128xf32>
    %61 = arith.maximumf %59, %60 : vector<16x128xf32>
    %c0_76 = arith.constant 0 : index
    %c0_77 = arith.constant 0 : index
    %62 = vector.load %arg15[%c0_76, %c0_77] : memref<128x128xf32, #tpu.memory_space<vmem>>, vector<128x128xf32>
    %c0_78 = arith.constant 0 : index
    %c0_79 = arith.constant 0 : index
    %63 = vector.load %arg16[%c0_78, %c0_79] : memref<1x128xf32, #tpu.memory_space<vmem>>, vector<1x128xf32>
    %cst_80 = arith.constant dense<0.000000e+00> : vector<16x128xf32>
    %64 = tpu.matmul %61, %62, %cst_80 {dimension_numbers = #tpu.dot_dimension_numbers<[1], [0], [0], [1], [0, 0, 1, 1], [], []>} : vector<16x128xf32>, vector<128x128xf32>, vector<16x128xf32> -> vector<16x128xf32>
    %65 = vector.broadcast %63 : vector<1x128xf32> to vector<16x128xf32>
    %66 = arith.addf %64, %65 : vector<16x128xf32>
    %cst_81 = arith.constant 0.000000e+00 : f32
    %67 = vector.broadcast %cst_81 : f32 to vector<16x128xf32>
    %68 = arith.maximumf %66, %67 : vector<16x128xf32>
    %c0_82 = arith.constant 0 : index
    %c0_83 = arith.constant 0 : index
    %69 = vector.load %arg20[%c0_82, %c0_83] : memref<16x128xf32, #tpu.memory_space<vmem>>, vector<16x128xf32>
    tpu.vector_store %arg20[%c0_82, %c0_83], %68 {strides = array<i32>} : memref<16x128xf32, #tpu.memory_space<vmem>>, vector<16x128xf32>,
    %c0_84 = arith.constant 0 : index
    %c0_85 = arith.constant 0 : index
    %70 = vector.load %arg17[%c0_84, %c0_85] : memref<128x128xf32, #tpu.memory_space<vmem>>, vector<128x128xf32>
    %c0_86 = arith.constant 0 : index
    %c0_87 = arith.constant 0 : index
    %71 = vector.load %arg18[%c0_86, %c0_87] : memref<1x128xf32, #tpu.memory_space<vmem>>, vector<1x128xf32>
    %c0_88 = arith.constant 0 : index
    %c0_89 = arith.constant 0 : index
    %72 = vector.load %arg20[%c0_88, %c0_89] : memref<16x128xf32, #tpu.memory_space<vmem>>, vector<16x128xf32>
    %cst_90 = arith.constant dense<0.000000e+00> : vector<16x128xf32>
    %73 = tpu.matmul %72, %70, %cst_90 {dimension_numbers = #tpu.dot_dimension_numbers<[1], [0], [0], [1], [0, 0, 1, 1], [], []>} : vector<16x128xf32>, vector<128x128xf32>, vector<16x128xf32> -> vector<16x128xf32>
    %74 = vector.broadcast %71 : vector<1x128xf32> to vector<16x128xf32>
    %75 = arith.addf %73, %74 : vector<16x128xf32>
    %76 = math.tanh %75 : vector<16x128xf32>
    %c0_91 = arith.constant 0 : index
    %c0_92 = arith.constant 0 : index
    %77 = vector.load %arg19[%c0_91, %c0_92] : memref<16x128xf32, #tpu.memory_space<vmem>>, vector<16x128xf32>
    tpu.vector_store %arg19[%c0_91, %c0_92], %76 {strides = array<i32>} : memref<16x128xf32, #tpu.memory_space<vmem>>, vector<16x128xf32>,
    return
  }
  func.func @transform_0(%arg0: i32, %arg1: memref<48xi32, #tpu.memory_space<smem>>, %arg2: memref<48xi32, #tpu.memory_space<smem>>) -> (i32, i32) {
    %c0_i32 = arith.constant 0 : i32
    %c0_i32_0 = arith.constant 0 : i32
    %c0_i32_1 = arith.constant 0 : i32
    return %c0_i32, %c0_i32_0 : i32, i32
  }
  func.func @transform_1(%arg0: i32, %arg1: memref<48xi32, #tpu.memory_space<smem>>, %arg2: memref<48xi32, #tpu.memory_space<smem>>) -> (i32, i32) {
    %c0_i32 = arith.constant 0 : i32
    %c0_i32_0 = arith.constant 0 : i32
    %c0_i32_1 = arith.constant 0 : i32
    return %c0_i32, %c0_i32_0 : i32, i32
  }
  func.func @transform_2(%arg0: i32, %arg1: memref<48xi32, #tpu.memory_space<smem>>, %arg2: memref<48xi32, #tpu.memory_space<smem>>) -> (i32, i32) {
    %c0_i32 = arith.constant 0 : i32
    %c0_i32_0 = arith.constant 0 : i32
    %c0_i32_1 = arith.constant 0 : i32
    return %c0_i32, %c0_i32_0 : i32, i32
  }
  func.func @transform_3(%arg0: i32, %arg1: memref<48xi32, #tpu.memory_space<smem>>, %arg2: memref<48xi32, #tpu.memory_space<smem>>) -> (i32, i32) {
    %c0_i32 = arith.constant 0 : i32
    %c0_i32_0 = arith.constant 0 : i32
    %c0_i32_1 = arith.constant 0 : i32
    return %c0_i32, %c0_i32_0 : i32, i32
  }
  func.func @transform_4(%arg0: i32, %arg1: memref<48xi32, #tpu.memory_space<smem>>, %arg2: memref<48xi32, #tpu.memory_space<smem>>) -> (i32, i32) {
    %c0_i32 = arith.constant 0 : i32
    %c0_i32_0 = arith.constant 0 : i32
    %c0_i32_1 = arith.constant 0 : i32
    return %c0_i32, %c0_i32_0 : i32, i32
  }
  func.func @transform_5(%arg0: i32, %arg1: memref<48xi32, #tpu.memory_space<smem>>, %arg2: memref<48xi32, #tpu.memory_space<smem>>) -> (i32, i32) {
    %c0_i32 = arith.constant 0 : i32
    %c0_i32_0 = arith.constant 0 : i32
    %c0_i32_1 = arith.constant 0 : i32
    return %c0_i32, %c0_i32_0 : i32, i32
  }
  func.func @transform_6(%arg0: i32, %arg1: memref<48xi32, #tpu.memory_space<smem>>, %arg2: memref<48xi32, #tpu.memory_space<smem>>) -> (i32, i32) {
    %c0_i32 = arith.constant 0 : i32
    %c0_i32_0 = arith.constant 0 : i32
    %c0_i32_1 = arith.constant 0 : i32
    return %c0_i32, %c0_i32_0 : i32, i32
  }
  func.func @transform_7(%arg0: i32, %arg1: memref<48xi32, #tpu.memory_space<smem>>, %arg2: memref<48xi32, #tpu.memory_space<smem>>) -> (i32, i32) {
    %c0_i32 = arith.constant 0 : i32
    %c0_i32_0 = arith.constant 0 : i32
    %c0_i32_1 = arith.constant 0 : i32
    return %c0_i32, %c0_i32_0 : i32, i32
  }
  func.func @transform_8(%arg0: i32, %arg1: memref<48xi32, #tpu.memory_space<smem>>, %arg2: memref<48xi32, #tpu.memory_space<smem>>) -> (i32, i32) {
    %c0_i32 = arith.constant 0 : i32
    %c0_i32_0 = arith.constant 0 : i32
    %c0_i32_1 = arith.constant 0 : i32
    return %c0_i32, %c0_i32_0 : i32, i32
  }
  func.func @transform_9(%arg0: i32, %arg1: memref<48xi32, #tpu.memory_space<smem>>, %arg2: memref<48xi32, #tpu.memory_space<smem>>) -> (i32, i32) {
    %c0_i32 = arith.constant 0 : i32
    %c0_i32_0 = arith.constant 0 : i32
    %c0_i32_1 = arith.constant 0 : i32
    return %c0_i32, %c0_i32_0 : i32, i32
  }
  func.func @transform_10(%arg0: i32, %arg1: memref<48xi32, #tpu.memory_space<smem>>, %arg2: memref<48xi32, #tpu.memory_space<smem>>) -> (i32, i32) {
    %c0_i32 = arith.constant 0 : i32
    %c0_i32_0 = arith.constant 0 : i32
    %c0_i32_1 = arith.constant 0 : i32
    return %c0_i32, %c0_i32_0 : i32, i32
  }
  func.func @transform_11(%arg0: i32, %arg1: memref<48xi32, #tpu.memory_space<smem>>, %arg2: memref<48xi32, #tpu.memory_space<smem>>) -> (i32, i32) {
    %c0_i32 = arith.constant 0 : i32
    %c0_i32_0 = arith.constant 0 : i32
    %c0_i32_1 = arith.constant 0 : i32
    return %c0_i32, %c0_i32_0 : i32, i32
  }
  func.func @transform_12(%arg0: i32, %arg1: memref<48xi32, #tpu.memory_space<smem>>, %arg2: memref<48xi32, #tpu.memory_space<smem>>) -> (i32, i32) {
    %c0_i32 = arith.constant 0 : i32
    %c0_i32_0 = arith.constant 0 : i32
    %c0_i32_1 = arith.constant 0 : i32
    return %c0_i32, %c0_i32_0 : i32, i32
  }
  func.func @transform_13(%arg0: i32, %arg1: memref<48xi32, #tpu.memory_space<smem>>, %arg2: memref<48xi32, #tpu.memory_space<smem>>) -> (i32, i32) {
    %c0_i32 = arith.constant 0 : i32
    %c0_i32_0 = arith.constant 0 : i32
    %c0_i32_1 = arith.constant 0 : i32
    return %c0_i32, %c0_i32_0 : i32, i32
  }
  func.func @transform_14(%arg0: i32, %arg1: memref<48xi32, #tpu.memory_space<smem>>, %arg2: memref<48xi32, #tpu.memory_space<smem>>) -> (i32, i32) {
    %c0_i32 = arith.constant 0 : i32
    %c0_i32_0 = arith.constant 0 : i32
    %c0_i32_1 = arith.constant 0 : i32
    return %c0_i32, %c0_i32_0 : i32, i32
  }
  func.func @transform_15(%arg0: i32, %arg1: memref<48xi32, #tpu.memory_space<smem>>, %arg2: memref<48xi32, #tpu.memory_space<smem>>) -> (i32, i32) {
    %c0_i32 = arith.constant 0 : i32
    %c0_i32_0 = arith.constant 0 : i32
    %c0_i32_1 = arith.constant 0 : i32
    return %c0_i32, %c0_i32_0 : i32, i32
  }
  func.func @transform_16(%arg0: i32, %arg1: memref<48xi32, #tpu.memory_space<smem>>, %arg2: memref<48xi32, #tpu.memory_space<smem>>) -> (i32, i32) {
    %c0_i32 = arith.constant 0 : i32
    %c0_i32_0 = arith.constant 0 : i32
    %c0_i32_1 = arith.constant 0 : i32
    return %c0_i32, %c0_i32_0 : i32, i32
  }
}

</mosaic_0001>

<llo_original>
// kernel: tpu_custom_call.1
$region0: #{tpu_custom_call.1}
  #allocation0 [shape = 'u32[]', space=smem, size = 0x4, offset = 0x4, fixed_abs, tag = 'smem constant byte address 0x4 - core index']
  #allocation1 [shape = 'u32[144,128]{1,0:T(1,128)}', space=vmem, size = 0x12000, scoped, tag = 'internal scratch']
  #allocation2 [shape = 'f32[16,128]{1,0:T(8,128)}', space=vmem, size = 0x2000, scoped, tag = 'scratch operand']
  #allocation3 [shape = 'f32[48,128]{1,0:T(8,128)}', space=vmem, size = 0x6000, scoped, tag = 'scratch operand']
  #allocation4 [shape = 'f32[16,128]{1,0:T(8,128)}', space=vmem, size = 0x2000, scoped, tag = 'scratch operand']
  #allocation5 [shape = 's32[1]{0}', space=sflag, size = 0x4, scoped, tag = 'scoped memory for tpu_custom_call.1']
  #allocation6 [shape = 'u8[512]{0}', space=smem, size = 0x200, scoped, tag = 'prefetched SMEM operand 0']
  #allocation7 [shape = 'u8[512]{0}', space=smem, size = 0x200, scoped, tag = 'prefetched SMEM operand 1']
  %s0 = inlined_call_operand.hbm [shape: s32[48], index: 0, kind: input, shape index: {}]
  %s1 = inlined_call_operand.vmem [shape: s32[48], index: 1, kind: input, shape index: {}]
  %s2 = inlined_call_operand.hbm [shape: f32[16,128], index: 2, kind: input, shape index: {}]
  %s3 = inlined_call_operand.hbm [shape: f32[48,128], index: 3, kind: input, shape index: {}]
  %s4 = inlined_call_operand.hbm [shape: f32[128,128], index: 4, kind: input, shape index: {}]
  %s5 = inlined_call_operand.vmem [shape: f32[1,128], index: 5, kind: input, shape index: {}]
  %s6 = inlined_call_operand.hbm [shape: f32[128,128], index: 6, kind: input, shape index: {}]
  %s7 = inlined_call_operand.vmem [shape: f32[1,128], index: 7, kind: input, shape index: {}]
  %s8 = inlined_call_operand.hbm [shape: f32[128,128], index: 8, kind: input, shape index: {}]
  %s9 = inlined_call_operand.vmem [shape: f32[1,128], index: 9, kind: input, shape index: {}]
  %s10 = inlined_call_operand.hbm [shape: f32[128,128], index: 10, kind: input, shape index: {}]
  %s11 = inlined_call_operand.vmem [shape: f32[1,128], index: 11, kind: input, shape index: {}]
  %s12 = inlined_call_operand.hbm [shape: f32[128,128], index: 12, kind: input, shape index: {}]
  %s13 = inlined_call_operand.vmem [shape: f32[1,128], index: 13, kind: input, shape index: {}]
  %s14 = inlined_call_operand.hbm [shape: f32[128,128], index: 14, kind: input, shape index: {}]
  %s15 = inlined_call_operand.vmem [shape: f32[1,128], index: 15, kind: input, shape index: {}]
  %s16 = inlined_call_operand.hbm [shape: f32[128,128], index: 16, kind: input, shape index: {}]
  %s17 = inlined_call_operand.vmem [shape: f32[1,128], index: 17, kind: input, shape index: {}]
  %s18 = inlined_call_operand.hbm [shape: f32[16,128], index: 18, kind: output, shape index: {}]
  %s19 = sld [smem:[#allocation0]]
  $region138: #{tpu_custom_call.1} parent=0
    _
  %s21 = ssub.s32 1, %s19
  %s22 = scalar_select 0, %s21, %s19
  %24 = dma.hbm_to_smem %s0, 16, [#allocation6], [#allocation5]
  %s25 = sshll.u32 %s1, 4
  %s26 = int_to_ptr.vmem [resolvable:$true] %s25
  %28 = dma.vmem_to_smem %s26, 16, [#allocation7], [#allocation5]
  %29 = dma.done [#allocation5], 32
  %30 = sfence
  $region1: #{tpu_custom_call.1} parent=0
    #allocation8 [shape = 'u8[8192]{0}', space=vmem, size = 0x2000, scoped, tag = 'input window, operand 2, single buffered']
    #allocation9 [shape = 's32[1]{0}', space=sflag, size = 0x4, scoped, tag = 'scoped memory for tpu_custom_call.1']
    #allocation10 [shape = 's32[1]{0}', space=sflag, size = 0x4, scoped, tag = 'scoped memory for tpu_custom_call.1']
    #allocation11 [shape = 'u8[24576]{0}', space=vmem, size = 0x6000, scoped, tag = 'input window, operand 3, single buffered']
    #allocation12 [shape = 's32[1]{0}', space=sflag, size = 0x4, scoped, tag = 'scoped memory for tpu_custom_call.1']
    #allocation13 [shape = 'u8[65536]{0}', space=vmem, size = 0x10000, scoped, tag = 'input window, operand 4, single buffered']
    #allocation14 [shape = 'u8[65536]{0}', space=vmem, size = 0x10000, scoped, tag = 'input window, operand 6, single buffered']
    #allocation15 [shape = 's32[1]{0}', space=sflag, size = 0x4, scoped, tag = 'scoped memory for tpu_custom_call.1']
    #allocation16 [shape = 'u8[65536]{0}', space=vmem, size = 0x10000, scoped, tag = 'input window, operand 8, single buffered']
    #allocation17 [shape = 'u8[65536]{0}', space=vmem, size = 0x10000, scoped, tag = 'input window, operand 10, single buffered']
    #allocation18 [shape = 's32[1]{0}', space=sflag, size = 0x4, scoped, tag = 'scoped memory for tpu_custom_call.1']
    #allocation19 [shape = 'u8[65536]{0}', space=vmem, size = 0x10000, scoped, tag = 'input window, operand 12, single buffered']
    #allocation20 [shape = 'u8[65536]{0}', space=vmem, size = 0x10000, scoped, tag = 'input window, operand 14, single buffered']
    #allocation21 [shape = 's32[1]{0}', space=sflag, size = 0x4, scoped, tag = 'scoped memory for tpu_custom_call.1']
    #allocation22 [shape = 'u8[65536]{0}', space=vmem, size = 0x10000, scoped, tag = 'input window, operand 16, single buffered']
    #allocation23 [shape = 'u8[8192]{0}', space=vmem, size = 0x2000, scoped, tag = 'output window, operand 0, single buffered']
    %31 = vsyncpa [#allocation9], 0
    %32 = vsyncpa [#allocation12], 0
    %33 = vsyncpa [#allocation15], 0
    %34 = vsyncpa [#allocation18], 0
    %35 = vsyncpa [#allocation21], 0
    %36 = vsyncpa [#allocation10], 0
    // Predicated region
    $region2: #{tpu_custom_call.1} parent=1 // pred_check
      _
    $region3: #{tpu_custom_call.1} parent=1 // pred_check_branch
      %38 = sbr.rel (0) target = $region5
    $region4: #{tpu_custom_call.1} parent=1 // pred_region
      %s40 = ssub.s32 256, 256
      %41 = vsyncadd [#allocation9], %s40
      %s42 = sshll.u32 [#allocation8], 4
      %s43 = int_to_ptr.vmem [resolvable:$true] %s42
      %48 = dma.hbm_to_vmem [thread:$0]  %s2, 256, %s43, [#allocation9], 128, 128, 8
    $region5: #{tpu_custom_call.1} parent=1 // pred_fallthru
      _
    // Predicated region
    $region6: #{tpu_custom_call.1} parent=1 // pred_check
      _
    $region7: #{tpu_custom_call.1} parent=1 // pred_check_branch
      %50 = sbr.rel (0) target = $region9
    $region8: #{tpu_custom_call.1} parent=1 // pred_region
      %s52 = ssub.s32 768, 768
      %53 = vsyncadd [#allocation12], %s52
      %s54 = sshll.u32 [#allocation11], 4
      %s55 = int_to_ptr.vmem [resolvable:$true] %s54
      %60 = dma.hbm_to_vmem [thread:$0]  %s3, 768, %s55, [#allocation12], 128, 128, 8
    $region9: #{tpu_custom_call.1} parent=1 // pred_fallthru
      _
    // Predicated region
    $region10: #{tpu_custom_call.1} parent=1 // pred_check
      _
    $region11: #{tpu_custom_call.1} parent=1 // pred_check_branch
      %62 = sbr.rel (0) target = $region13
    $region12: #{tpu_custom_call.1} parent=1 // pred_region
      %s64 = ssub.s32 2048, 2048
      %65 = vsyncadd [#allocation12], %s64
      %s66 = sshll.u32 [#allocation13], 4
      %s67 = int_to_ptr.vmem [resolvable:$true] %s66
      %72 = dma.hbm_to_vmem [thread:$0]  %s4, 2048, %s67, [#allocation12], 128, 128, 8
    $region13: #{tpu_custom_call.1} parent=1 // pred_fallthru
      _
    // Predicated region
    $region14: #{tpu_custom_call.1} parent=1 // pred_check
      _
    $region15: #{tpu_custom_call.1} parent=1 // pred_check_branch
      %74 = sbr.rel (0) target = $region17
    $region16: #{tpu_custom_call.1} parent=1 // pred_region
      _
    $region17: #{tpu_custom_call.1} parent=1 // pred_fallthru
      _
    // Predicated region
    $region18: #{tpu_custom_call.1} parent=1 // pred_check
      _
    $region19: #{tpu_custom_call.1} parent=1 // pred_check_branch
      %76 = sbr.rel (0) target = $region21
    $region20: #{tpu_custom_call.1} parent=1 // pred_region
      %s78 = ssub.s32 2048, 2048
      %79 = vsyncadd [#allocation15], %s78
      %s80 = sshll.u32 [#allocation14], 4
      %s81 = int_to_ptr.vmem [resolvable:$true] %s80
      %86 = dma.hbm_to_vmem [thread:$0]  %s6, 2048, %s81, [#allocation15], 128, 128, 8
    $region21: #{tpu_custom_call.1} parent=1 // pred_fallthru
      _
    // Predicated region
    $region22: #{tpu_custom_call.1} parent=1 // pred_check
      _
    $region23: #{tpu_custom_call.1} parent=1 // pred_check_branch
      %88 = sbr.rel (0) target = $region25
    $region24: #{tpu_custom_call.1} parent=1 // pred_region
      _
    $region25: #{tpu_custom_call.1} parent=1 // pred_fallthru
      _
    // Predicated region
    $region26: #{tpu_custom_call.1} parent=1 // pred_check
      _
    $region27: #{tpu_custom_call.1} parent=1 // pred_check_branch
      %90 = sbr.rel (0) target = $region29
    $region28: #{tpu_custom_call.1} parent=1 // pred_region
      %s92 = ssub.s32 2048, 2048
      %93 = vsyncadd [#allocation15], %s92
      %s94 = sshll.u32 [#allocation16], 4
      %s95 = int_to_ptr.vmem [resolvable:$true] %s94
      %100 = dma.hbm_to_vmem [thread:$0]  %s8, 2048, %s95, [#allocation15], 128, 128, 8
    $region29: #{tpu_custom_call.1} parent=1 // pred_fallthru
      _
    // Predicated region
    $region30: #{tpu_custom_call.1} parent=1 // pred_check
      _
    $region31: #{tpu_custom_call.1} parent=1 // pred_check_branch
      %102 = sbr.rel (0) target = $region33
    $region32: #{tpu_custom_call.1} parent=1 // pred_region
      _
    $region33: #{tpu_custom_call.1} parent=1 // pred_fallthru
      _
    // Predicated region
    $region34: #{tpu_custom_call.1} parent=1 // pred_check
      _
    $region35: #{tpu_custom_call.1} parent=1 // pred_check_branch
      %104 = sbr.rel (0) target = $region37
    $region36: #{tpu_custom_call.1} parent=1 // pred_region
      %s106 = ssub.s32 2048, 2048
      %107 = vsyncadd [#allocation18], %s106
      %s108 = sshll.u32 [#allocation17], 4
      %s109 = int_to_ptr.vmem [resolvable:$true] %s108
      %114 = dma.hbm_to_vmem [thread:$0]  %s10, 2048, %s109, [#allocation18], 128, 128, 8
    $region37: #{tpu_custom_call.1} parent=1 // pred_fallthru
      _
    // Predicated region
    $region38: #{tpu_custom_call.1} parent=1 // pred_check
      _
    $region39: #{tpu_custom_call.1} parent=1 // pred_check_branch
      %116 = sbr.rel (0) target = $region41
    $region40: #{tpu_custom_call.1} parent=1 // pred_region
      _
    $region41: #{tpu_custom_call.1} parent=1 // pred_fallthru
      _
    // Predicated region
    $region42: #{tpu_custom_call.1} parent=1 // pred_check
      _
    $region43: #{tpu_custom_call.1} parent=1 // pred_check_branch
      %118 = sbr.rel (0) target = $region45
    $region44: #{tpu_custom_call.1} parent=1 // pred_region
      %s120 = ssub.s32 2048, 2048
      %121 = vsyncadd [#allocation18], %s120
      %s122 = sshll.u32 [#allocation19], 4
      %s123 = int_to_ptr.vmem [resolvable:$true] %s122
      %128 = dma.hbm_to_vmem [thread:$0]  %s12, 2048, %s123, [#allocation18], 128, 128, 8
    $region45: #{tpu_custom_call.1} parent=1 // pred_fallthru
      _
    // Predicated region
    $region46: #{tpu_custom_call.1} parent=1 // pred_check
      _
    $region47: #{tpu_custom_call.1} parent=1 // pred_check_branch
      %130 = sbr.rel (0) target = $region49
    $region48: #{tpu_custom_call.1} parent=1 // pred_region
      _
    $region49: #{tpu_custom_call.1} parent=1 // pred_fallthru
      _
    // Predicated region
    $region50: #{tpu_custom_call.1} parent=1 // pred_check
      _
    $region51: #{tpu_custom_call.1} parent=1 // pred_check_branch
      %132 = sbr.rel (0) target = $region53
    $region52: #{tpu_custom_call.1} parent=1 // pred_region
      %s134 = ssub.s32 2048, 2048
      %135 = vsyncadd [#allocation21], %s134
      %s136 = sshll.u32 [#allocation20], 4
      %s137 = int_to_ptr.vmem [resolvable:$true] %s136
      %142 = dma.hbm_to_vmem [thread:$0]  %s14, 2048, %s137, [#allocation21], 128, 128, 8
    $region53: #{tpu_custom_call.1} parent=1 // pred_fallthru
      _
    // Predicated region
    $region54: #{tpu_custom_call.1} parent=1 // pred_check
      _
    $region55: #{tpu_custom_call.1} parent=1 // pred_check_branch
      %144 = sbr.rel (0) target = $region57
    $region56: #{tpu_custom_call.1} parent=1 // pred_region
      _
    $region57: #{tpu_custom_call.1} parent=1 // pred_fallthru
      _
    // Predicated region
    $region58: #{tpu_custom_call.1} parent=1 // pred_check
      _
    $region59: #{tpu_custom_call.1} parent=1 // pred_check_branch
      %146 = sbr.rel (0) target = $region61
    $region60: #{tpu_custom_call.1} parent=1 // pred_region
      %s148 = ssub.s32 2048, 2048
      %149 = vsyncadd [#allocation21], %s148
      %s150 = sshll.u32 [#allocation22], 4
      %s151 = int_to_ptr.vmem [resolvable:$true] %s150
      %156 = dma.hbm_to_vmem [thread:$0]  %s16, 2048, %s151, [#allocation21], 128, 128, 8
    $region61: #{tpu_custom_call.1} parent=1 // pred_fallthru
      _
    // Predicated region
    $region62: #{tpu_custom_call.1} parent=1 // pred_check
      _
    $region63: #{tpu_custom_call.1} parent=1 // pred_check_branch
      %158 = sbr.rel (0) target = $region65
    $region64: #{tpu_custom_call.1} parent=1 // pred_region
      _
    $region65: #{tpu_custom_call.1} parent=1 // pred_fallthru
      _
    // Predicated region
    $region66: #{tpu_custom_call.1} parent=1 // pred_check
      _
    $region67: #{tpu_custom_call.1} parent=1 // pred_check_branch
      %160 = sbr.rel (0) target = $region69
    $region68: #{tpu_custom_call.1} parent=1 // pred_region
      %161 = dma.done [#allocation9], 256
    $region69: #{tpu_custom_call.1} parent=1 // pred_fallthru
      _
    // Predicated region
    $region70: #{tpu_custom_call.1} parent=1 // pred_check
      _
    $region71: #{tpu_custom_call.1} parent=1 // pred_check_branch
      %163 = sbr.rel (0) target = $region73
    $region72: #{tpu_custom_call.1} parent=1 // pred_region
      %164 = dma.done [#allocation12], 768
    $region73: #{tpu_custom_call.1} parent=1 // pred_fallthru
      _
    // Predicated region
    $region74: #{tpu_custom_call.1} parent=1 // pred_check
      _
    $region75: #{tpu_custom_call.1} parent=1 // pred_check_branch
      %166 = sbr.rel (0) target = $region77
    $region76: #{tpu_custom_call.1} parent=1 // pred_region
      %167 = dma.done [#allocation12], 2048
    $region77: #{tpu_custom_call.1} parent=1 // pred_fallthru
      _
    // Predicated region
    $region78: #{tpu_custom_call.1} parent=1 // pred_check
      _
    $region79: #{tpu_custom_call.1} parent=1 // pred_check_branch
      %169 = sbr.rel (0) target = $region81
    $region80: #{tpu_custom_call.1} parent=1 // pred_region
      %170 = dma.done [#allocation15], 2048
    $region81: #{tpu_custom_call.1} parent=1 // pred_fallthru
      _
    // Predicated region
    $region82: #{tpu_custom_call.1} parent=1 // pred_check
      _
    $region83: #{tpu_custom_call.1} parent=1 // pred_check_branch
      %172 = sbr.rel (0) target = $region85
    $region84: #{tpu_custom_call.1} parent=1 // pred_region
      %173 = dma.done [#allocation15], 2048
    $region85: #{tpu_custom_call.1} parent=1 // pred_fallthru
      _
    // Predicated region
    $region86: #{tpu_custom_call.1} parent=1 // pred_check
      _
    $region87: #{tpu_custom_call.1} parent=1 // pred_check_branch
      %175 = sbr.rel (0) target = $region89
    $region88: #{tpu_custom_call.1} parent=1 // pred_region
      %176 = dma.done [#allocation18], 2048
    $region89: #{tpu_custom_call.1} parent=1 // pred_fallthru
      _
    // Predicated region
    $region90: #{tpu_custom_call.1} parent=1 // pred_check
      _
    $region91: #{tpu_custom_call.1} parent=1 // pred_check_branch
      %178 = sbr.rel (0) target = $region93
    $region92: #{tpu_custom_call.1} parent=1 // pred_region
      %179 = dma.done [#allocation18], 2048
    $region93: #{tpu_custom_call.1} parent=1 // pred_fallthru
      _
    // Predicated region
    $region94: #{tpu_custom_call.1} parent=1 // pred_check
      _
    $region95: #{tpu_custom_call.1} parent=1 // pred_check_branch
      %181 = sbr.rel (0) target = $region97
    $region96: #{tpu_custom_call.1} parent=1 // pred_region
      %182 = dma.done [#allocation21], 2048
    $region97: #{tpu_custom_call.1} parent=1 // pred_fallthru
      _
    // Predicated region
    $region98: #{tpu_custom_call.1} parent=1 // pred_check
      _
    $region99: #{tpu_custom_call.1} parent=1 // pred_check_branch
      %184 = sbr.rel (0) target = $region101
    $region100: #{tpu_custom_call.1} parent=1 // pred_region
      %185 = dma.done [#allocation21], 2048
    $region101: #{tpu_custom_call.1} parent=1 // pred_fallthru
      _
    %v186 = vld [vmem:[#allocation8] sm:$0xff]
    %v187 = vld [vmem:[#allocation8 + $0x8] sm:$0xff]
    %188 = vst [vmem:[#allocation2] sm:$0xff] %v186
    %189 = vst [vmem:[#allocation2 + $0x8] sm:$0xff] %v187
    %190 = vst [vmem:[#allocation3] sm:$0xff] 0.0
    %191 = vst [vmem:[#allocation3 + $0x8] sm:$0xff] 0.0
    %192 = vst [vmem:[#allocation3 + $0x10] sm:$0xff] 0.0
    %193 = vst [vmem:[#allocation3 + $0x18] sm:$0xff] 0.0
    %194 = vst [vmem:[#allocation3 + $0x20] sm:$0xff] 0.0
    %195 = vst [vmem:[#allocation3 + $0x28] sm:$0xff] 0.0
    %v196 = vld [vmem:[#allocation13] sm:$0xff]
    %v197 = vld [vmem:[#allocation13 + $0x8] sm:$0xff]
    %v198 = vld [vmem:[#allocation13 + $0x10] sm:$0xff]
    %v199 = vld [vmem:[#allocation13 + $0x18] sm:$0xff]
    %v200 = vld [vmem:[#allocation13 + $0x20] sm:$0xff]
    %v201 = vld [vmem:[#allocation13 + $0x28] sm:$0xff]
    %v202 = vld [vmem:[#allocation13 + $0x30] sm:$0xff]
    %v203 = vld [vmem:[#allocation13 + $0x38] sm:$0xff]
    %v204 = vld [vmem:[#allocation13 + $0x40] sm:$0xff]
    %v205 = vld [vmem:[#allocation13 + $0x48] sm:$0xff]
    %v206 = vld [vmem:[#allocation13 + $0x50] sm:$0xff]
    %v207 = vld [vmem:[#allocation13 + $0x58] sm:$0xff]
    %v208 = vld [vmem:[#allocation13 + $0x60] sm:$0xff]
    %v209 = vld [vmem:[#allocation13 + $0x68] sm:$0xff]
    %v210 = vld [vmem:[#allocation13 + $0x70] sm:$0xff]
    %v211 = vld [vmem:[#allocation13 + $0x78] sm:$0xff]
    %v212 = vld [vmem:[%s5] sm:$0x1]
    %v213 = vld [vmem:[#allocation11] sm:$0xff]
    %v214 = vld [vmem:[#allocation11 + $0x8] sm:$0xff]
    %v215 = vld [vmem:[#allocation11 + $0x10] sm:$0xff]
    %v216 = vld [vmem:[#allocation11 + $0x18] sm:$0xff]
    %v217 = vld [vmem:[#allocation11 + $0x20] sm:$0xff]
    %v218 = vld [vmem:[#allocation11 + $0x28] sm:$0xff]
    %v220 = vlaneseq
    %v221 = vshrl.u32 %v220, 7
    %v222 = vsub.s32 0, %v221
    %v223 = vrot.slane %v212, %v222
    %225 = vmatprep.subr.mxu0 0.0
    %226 = vmatpush1.msra.mxu0 %v211
    %227 = vmatprep.subr.mxu0 0.0
    %228 = vmatpush1.msra.mxu0 %v210
    %229 = vmatprep.subr.mxu0 0.0
    %230 = vmatpush1.msra.mxu0 %v209
    %231 = vmatprep.subr.mxu0 0.0
    %232 = vmatpush1.msra.mxu0 %v208
    %233 = vmatprep.subr.mxu0 0.0
    %234 = vmatpush1.msra.mxu0 %v207
    %235 = vmatprep.subr.mxu0 0.0
    %236 = vmatpush1.msra.mxu0 %v206
    %237 = vmatprep.subr.mxu0 0.0
    %238 = vmatpush1.msra.mxu0 %v205
    %239 = vmatprep.subr.mxu0 0.0
    %240 = vmatpush1.msra.mxu0 %v204
    %241 = vmatprep.subr.mxu0 0.0
    %242 = vmatpush1.msra.mxu0 %v203
    %243 = vmatprep.subr.mxu0 0.0
    %244 = vmatpush1.msra.mxu0 %v202
    %245 = vmatprep.subr.mxu0 0.0
    %246 = vmatpush1.msra.mxu0 %v201
    %247 = vmatprep.subr.mxu0 0.0
    %248 = vmatpush1.msra.mxu0 %v200
    %249 = vmatprep.subr.mxu0 0.0
    %250 = vmatpush1.msra.mxu0 %v199
    %251 = vmatprep.subr.mxu0 0.0
    %252 = vmatpush1.msra.mxu0 %v198
    %253 = vmatprep.subr.mxu0 0.0
    %254 = vmatpush1.msra.mxu0 %v197
    %255 = vmatprep.subr.mxu0 0.0
    %256 = vmatpush1.msra.mxu0 %v196
    %257 = vmatprep.subr.mxu0 0.0
    %258 = vmatpush2.msra.mxu0 0.0
    %259 = vmatprep.subr.mxu0 0.0
    %260 = vmatpush2.msra.mxu0 0.0
    %261 = vmatprep.subr.mxu0 0.0
    %262 = vmatpush2.msra.mxu0 0.0
    %263 = vmatprep.subr.mxu0 0.0
    %264 = vmatpush2.msra.mxu0 0.0
    %265 = vmatprep.subr.mxu0 0.0
    %266 = vmatpush2.msra.mxu0 0.0
    %267 = vmatprep.subr.mxu0 0.0
    %268 = vmatpush2.msra.mxu0 0.0
    %269 = vmatprep.subr.mxu0 0.0
    %270 = vmatpush2.msra.mxu0 0.0
    %271 = vmatprep.subr.mxu0 0.0
    %272 = vmatpush2.msra.mxu0 0.0
    %273 = vmatprep.subr.mxu0 0.0
    %274 = vmatpush2.msra.mxu0 0.0
    %275 = vmatprep.subr.mxu0 0.0
    %276 = vmatpush2.msra.mxu0 0.0
    %277 = vmatprep.subr.mxu0 0.0
    %278 = vmatpush2.msra.mxu0 0.0
    %279 = vmatprep.subr.mxu0 0.0
    %280 = vmatpush2.msra.mxu0 0.0
    %281 = vmatprep.subr.mxu0 0.0
    %282 = vmatpush2.msra.mxu0 0.0
    %283 = vmatprep.subr.mxu0 0.0
    %284 = vmatpush2.msra.mxu0 0.0
    %285 = vmatprep.subr.mxu0 0.0
    %286 = vmatpush2.msra.mxu0 0.0
    %287 = vmatprep.subr.mxu0 0.0
    %288 = vmatpush2.msra.mxu0 0.0
    %289 = vmatprep.mubr.f32.mxu0 0.0
    %290 = vmatmul.mubr.f32.gmra.mxu0 %v213
    %v291 = vpop.f32.mrf.mxu0
    %v292 = vadd.f32 %v223, %v291
    %v293 = vpop.f32.mrf.mxu0
    %294 = vmatprep.mubr.f32.mxu0 0.0
    %295 = vmatmul.mubr.f32.gmra.mxu0 %v214
    %v296 = vpop.f32.mrf.mxu0
    %v297 = vadd.f32 %v223, %v296
    %v298 = vpop.f32.mrf.mxu0
    %299 = vmatprep.mubr.f32.mxu0 0.0
    %300 = vmatmul.mubr.f32.gmra.mxu0 %v215
    %v301 = vpop.f32.mrf.mxu0
    %v302 = vadd.f32 %v223, %v301
    %v303 = vpop.f32.mrf.mxu0
    %304 = vmatprep.mubr.f32.mxu0 0.0
    %305 = vmatmul.mubr.f32.gmra.mxu0 %v216
    %v306 = vpop.f32.mrf.mxu0
    %v307 = vadd.f32 %v223, %v306
    %v308 = vpop.f32.mrf.mxu0
    %309 = vmatprep.mubr.f32.mxu0 0.0
    %310 = vmatmul.mubr.f32.gmra.mxu0 %v217
    %v311 = vpop.f32.mrf.mxu0
    %v312 = vadd.f32 %v223, %v311
    %v313 = vpop.f32.mrf.mxu0
    %314 = vmatprep.mubr.f32.mxu0 0.0
    %315 = vmatmul.mubr.f32.gmra.mxu0 %v218
    %v316 = vpop.f32.mrf.mxu0
    %v317 = vadd.f32 %v223, %v316
    %v318 = vpop.f32.mrf.mxu0
    %319 = vdwg.mxu0
    loop: start=0, step=1, limit=48
    $region102: #{tpu_custom_call.1} parent=1 // loop_pre_header
      _
    $region103: #{tpu_custom_call.1} parent=1 // loop_header
      %s321 = sphi 0, %s325
      %p322 = scmp.ge.s32.totalorder %s321, 48
    $region104: #{tpu_custom_call.1} parent=1 // loop_header_branch
      %324 = sbr.rel (%p322) target = $region108
    $region105: #{tpu_custom_call.1} parent=1 // loop_body
      %s326 = sld [smem:[#allocation6 + %s321]]
      %s327 = scalar_lea.vmem [#allocation2], %s326
      %v328 = vld [vmem:[%s327] sm:$0x1]
      %s329 = scalar_lea.vmem [#allocation3], %s321
      %330 = vst [vmem:[%s329] sm:$0x1] %v328
    $region106: #{tpu_custom_call.1} parent=1 // loop_footer
      %s325 = sadd.s32 1, %s321
    $region107: #{tpu_custom_call.1} parent=1 // loop_footer_branch
      %320 = sbr.rel target = $region103
    $region108: #{tpu_custom_call.1} parent=1 // loop_exit
      _
    %v331 = vld [vmem:[#allocation3] sm:$0xff]
    %v332 = vld [vmem:[#allocation3 + $0x8] sm:$0xff]
    %v333 = vld [vmem:[#allocation3 + $0x10] sm:$0xff]
    %v334 = vld [vmem:[#allocation3 + $0x18] sm:$0xff]
    %v335 = vld [vmem:[#allocation3 + $0x20] sm:$0xff]
    %v336 = vld [vmem:[#allocation3 + $0x28] sm:$0xff]
    %v337 = vadd.f32 %v331, %v292
    %v338 = vadd.f32 %v332, %v297
    %v339 = vadd.f32 %v333, %v302
    %v340 = vadd.f32 %v334, %v307
    %v341 = vadd.f32 %v335, %v312
    %v342 = vadd.f32 %v336, %v317
    %v343 = vmax.f32 %v337, 0.0
    %v344 = vmax.f32 %v338, 0.0
    %v345 = vmax.f32 %v339, 0.0
    %v346 = vmax.f32 %v340, 0.0
    %v347 = vmax.f32 %v341, 0.0
    %v348 = vmax.f32 %v342, 0.0
    %349 = vst [vmem:[#allocation3] sm:$0xff] %v343
    %350 = vst [vmem:[#allocation3 + $0x8] sm:$0xff] %v344
    %351 = vst [vmem:[#allocation3 + $0x10] sm:$0xff] %v345
    %352 = vst [vmem:[#allocation3 + $0x18] sm:$0xff] %v346
    %353 = vst [vmem:[#allocation3 + $0x20] sm:$0xff] %v347
    %354 = vst [vmem:[#allocation3 + $0x28] sm:$0xff] %v348
    %355 = vst [vmem:[#allocation4] sm:$0xff] 0.0
    %356 = vst [vmem:[#allocation4 + $0x8] sm:$0xff] 0.0
    loop: start=0, step=1, limit=48
    $region109: #{tpu_custom_call.1} parent=1 // loop_pre_header
      _
    $region110: #{tpu_custom_call.1} parent=1 // loop_header
      %s358 = sphi 0, %s362
      %p359 = scmp.ge.s32.totalorder %s358, 48
    $region111: #{tpu_custom_call.1} parent=1 // loop_header_branch
      %361 = sbr.rel (%p359) target = $region115
    $region112: #{tpu_custom_call.1} parent=1 // loop_body
      %s363 = sld [smem:[#allocation7 + %s358]]
      %s364 = scalar_lea.vmem [#allocation4], %s363
      %v365 = vld [vmem:[%s364] sm:$0x1]
      %s366 = scalar_lea.vmem [#allocation3], %s358
      %v367 = vld [vmem:[%s366] sm:$0x1]
      %v368 = vadd.f32 %v365, %v367
      %369 = vst [vmem:[%s364] sm:$0x1] %v368
    $region113: #{tpu_custom_call.1} parent=1 // loop_footer
      %s362 = sadd.s32 1, %s358
    $region114: #{tpu_custom_call.1} parent=1 // loop_footer_branch
      %357 = sbr.rel target = $region110
    $region115: #{tpu_custom_call.1} parent=1 // loop_exit
      _
    %v370 = vld [vmem:[#allocation2] sm:$0xff]
    %v371 = vld [vmem:[#allocation2 + $0x8] sm:$0xff]
    %v372 = vld [vmem:[#allocation4] sm:$0xff]
    %v373 = vld [vmem:[#allocation4 + $0x8] sm:$0xff]
    %v374 = vadd.f32 %v370, %v372
    %v375 = vadd.f32 %v371, %v373
    %v376 = vld [vmem:[#allocation14] sm:$0xff]
    %v377 = vld [vmem:[#allocation14 + $0x8] sm:$0xff]
    %v378 = vld [vmem:[#allocation14 + $0x10] sm:$0xff]
    %v379 = vld [vmem:[#allocation14 + $0x18] sm:$0xff]
    %v380 = vld [vmem:[#allocation14 + $0x20] sm:$0xff]
    %v381 = vld [vmem:[#allocation14 + $0x28] sm:$0xff]
    %v382 = vld [vmem:[#allocation14 + $0x30] sm:$0xff]
    %v383 = vld [vmem:[#allocation14 + $0x38] sm:$0xff]
    %v384 = vld [vmem:[#allocation14 + $0x40] sm:$0xff]
    %v385 = vld [vmem:[#allocation14 + $0x48] sm:$0xff]
    %v386 = vld [vmem:[#allocation14 + $0x50] sm:$0xff]
    %v387 = vld [vmem:[#allocation14 + $0x58] sm:$0xff]
    %v388 = vld [vmem:[#allocation14 + $0x60] sm:$0xff]
    %v389 = vld [vmem:[#allocation14 + $0x68] sm:$0xff]
    %v390 = vld [vmem:[#allocation14 + $0x70] sm:$0xff]
    %v391 = vld [vmem:[#allocation14 + $0x78] sm:$0xff]
    %v392 = vld [vmem:[%s7] sm:$0x1]
    %v394 = vlaneseq
    %v395 = vshrl.u32 %v394, 7
    %v396 = vsub.s32 0, %v395
    %v397 = vrot.slane %v392, %v396
    %399 = vmatprep.subr.mxu0 0.0
    %400 = vmatpush1.msra.mxu0 %v391
    %401 = vmatprep.subr.mxu0 0.0
    %402 = vmatpush1.msra.mxu0 %v390
    %403 = vmatprep.subr.mxu0 0.0
    %404 = vmatpush1.msra.mxu0 %v389
    %405 = vmatprep.subr.mxu0 0.0
    %406 = vmatpush1.msra.mxu0 %v388
    %407 = vmatprep.subr.mxu0 0.0
    %408 = vmatpush1.msra.mxu0 %v387
    %409 = vmatprep.subr.mxu0 0.0
    %410 = vmatpush1.msra.mxu0 %v386
    %411 = vmatprep.subr.mxu0 0.0
    %412 = vmatpush1.msra.mxu0 %v385
    %413 = vmatprep.subr.mxu0 0.0
    %414 = vmatpush1.msra.mxu0 %v384
    %415 = vmatprep.subr.mxu0 0.0
    %416 = vmatpush1.msra.mxu0 %v383
    %417 = vmatprep.subr.mxu0 0.0
    %418 = vmatpush1.msra.mxu0 %v382
    %419 = vmatprep.subr.mxu0 0.0
    %420 = vmatpush1.msra.mxu0 %v381
    %421 = vmatprep.subr.mxu0 0.0
    %422 = vmatpush1.msra.mxu0 %v380
    %423 = vmatprep.subr.mxu0 0.0
    %424 = vmatpush1.msra.mxu0 %v379
    %425 = vmatprep.subr.mxu0 0.0
    %426 = vmatpush1.msra.mxu0 %v378
    %427 = vmatprep.subr.mxu0 0.0
    %428 = vmatpush1.msra.mxu0 %v377
    %429 = vmatprep.subr.mxu0 0.0
    %430 = vmatpush1.msra.mxu0 %v376
    %431 = vmatprep.subr.mxu0 0.0
    %432 = vmatpush2.msra.mxu0 0.0
    %433 = vmatprep.subr.mxu0 0.0
    %434 = vmatpush2.msra.mxu0 0.0
    %435 = vmatprep.subr.mxu0 0.0
    %436 = vmatpush2.msra.mxu0 0.0
    %437 = vmatprep.subr.mxu0 0.0
    %438 = vmatpush2.msra.mxu0 0.0
    %439 = vmatprep.subr.mxu0 0.0
    %440 = vmatpush2.msra.mxu0 0.0
    %441 = vmatprep.subr.mxu0 0.0
    %442 = vmatpush2.msra.mxu0 0.0
    %443 = vmatprep.subr.mxu0 0.0
    %444 = vmatpush2.msra.mxu0 0.0
    %445 = vmatprep.subr.mxu0 0.0
    %446 = vmatpush2.msra.mxu0 0.0
    %447 = vmatprep.subr.mxu0 0.0
    %448 = vmatpush2.msra.mxu0 0.0
    %449 = vmatprep.subr.mxu0 0.0
    %450 = vmatpush2.msra.mxu0 0.0
    %451 = vmatprep.subr.mxu0 0.0
    %452 = vmatpush2.msra.mxu0 0.0
    %453 = vmatprep.subr.mxu0 0.0
    %454 = vmatpush2.msra.mxu0 0.0
    %455 = vmatprep.subr.mxu0 0.0
    %456 = vmatpush2.msra.mxu0 0.0
    %457 = vmatprep.subr.mxu0 0.0
    %458 = vmatpush2.msra.mxu0 0.0
    %459 = vmatprep.subr.mxu0 0.0
    %460 = vmatpush2.msra.mxu0 0.0
    %461 = vmatprep.subr.mxu0 0.0
    %462 = vmatpush2.msra.mxu0 0.0
    %463 = vmatprep.mubr.f32.mxu0 0.0
    %464 = vmatmul.mubr.f32.gmra.mxu0 %v374
    %v465 = vpop.f32.mrf.mxu0
    %v466 = vadd.f32 %v397, %v465
    %v467 = vpop.f32.mrf.mxu0
    %468 = vmatprep.mubr.f32.mxu0 0.0
    %469 = vmatmul.mubr.f32.gmra.mxu0 %v375
    %v470 = vpop.f32.mrf.mxu0
    %v471 = vadd.f32 %v397, %v470
    %v472 = vpop.f32.mrf.mxu0
    %473 = vdwg.mxu0
    %v474 = vmax.f32 %v466, 0.0
    %v475 = vmax.f32 %v471, 0.0
    %v476 = vld [vmem:[#allocation16] sm:$0xff]
    %v477 = vld [vmem:[#allocation16 + $0x8] sm:$0xff]
    %v478 = vld [vmem:[#allocation16 + $0x10] sm:$0xff]
    %v479 = vld [vmem:[#allocation16 + $0x18] sm:$0xff]
    %v480 = vld [vmem:[#allocation16 + $0x20] sm:$0xff]
    %v481 = vld [vmem:[#allocation16 + $0x28] sm:$0xff]
    %v482 = vld [vmem:[#allocation16 + $0x30] sm:$0xff]
    %v483 = vld [vmem:[#allocation16 + $0x38] sm:$0xff]
    %v484 = vld [vmem:[#allocation16 + $0x40] sm:$0xff]
    %v485 = vld [vmem:[#allocation16 + $0x48] sm:$0xff]
    %v486 = vld [vmem:[#allocation16 + $0x50] sm:$0xff]
    %v487 = vld [vmem:[#allocation16 + $0x58] sm:$0xff]
    %v488 = vld [vmem:[#allocation16 + $0x60] sm:$0xff]
    %v489 = vld [vmem:[#allocation16 + $0x68] sm:$0xff]
    %v490 = vld [vmem:[#allocation16 + $0x70] sm:$0xff]
    %v491 = vld [vmem:[#allocation16 + $0x78] sm:$0xff]
    %v492 = vld [vmem:[%s9] sm:$0x1]
    %v494 = vlaneseq
    %v495 = vshrl.u32 %v494, 7
    %v496 = vsub.s32 0, %v495
    %v497 = vrot.slane %v492, %v496
    %499 = vmatprep.subr.mxu0 0.0
    %500 = vmatpush1.msra.mxu0 %v491
    %501 = vmatprep.subr.mxu0 0.0
    %502 = vmatpush1.msra.mxu0 %v490
    %503 = vmatprep.subr.mxu0 0.0
    %504 = vmatpush1.msra.mxu0 %v489
    %505 = vmatprep.subr.mxu0 0.0
    %506 = vmatpush1.msra.mxu0 %v488
    %507 = vmatprep.subr.mxu0 0.0
    %508 = vmatpush1.msra.mxu0 %v487
    %509 = vmatprep.subr.mxu0 0.0
    %510 = vmatpush1.msra.mxu0 %v486
    %511 = vmatprep.subr.mxu0 0.0
    %512 = vmatpush1.msra.mxu0 %v485
    %513 = vmatprep.subr.mxu0 0.0
    %514 = vmatpush1.msra.mxu0 %v484
    %515 = vmatprep.subr.mxu0 0.0
    %516 = vmatpush1.msra.mxu0 %v483
    %517 = vmatprep.subr.mxu0 0.0
    %518 = vmatpush1.msra.mxu0 %v482
    %519 = vmatprep.subr.mxu0 0.0
    %520 = vmatpush1.msra.mxu0 %v481
    %521 = vmatprep.subr.mxu0 0.0
    %522 = vmatpush1.msra.mxu0 %v480
    %523 = vmatprep.subr.mxu0 0.0
    %524 = vmatpush1.msra.mxu0 %v479
    %525 = vmatprep.subr.mxu0 0.0
    %526 = vmatpush1.msra.mxu0 %v478
    %527 = vmatprep.subr.mxu0 0.0
    %528 = vmatpush1.msra.mxu0 %v477
    %529 = vmatprep.subr.mxu0 0.0
    %530 = vmatpush1.msra.mxu0 %v476
    %531 = vmatprep.subr.mxu0 0.0
    %532 = vmatpush2.msra.mxu0 0.0
    %533 = vmatprep.subr.mxu0 0.0
    %534 = vmatpush2.msra.mxu0 0.0
    %535 = vmatprep.subr.mxu0 0.0
    %536 = vmatpush2.msra.mxu0 0.0
    %537 = vmatprep.subr.mxu0 0.0
    %538 = vmatpush2.msra.mxu0 0.0
    %539 = vmatprep.subr.mxu0 0.0
    %540 = vmatpush2.msra.mxu0 0.0
    %541 = vmatprep.subr.mxu0 0.0
    %542 = vmatpush2.msra.mxu0 0.0
    %543 = vmatprep.subr.mxu0 0.0
    %544 = vmatpush2.msra.mxu0 0.0
    %545 = vmatprep.subr.mxu0 0.0
    %546 = vmatpush2.msra.mxu0 0.0
    %547 = vmatprep.subr.mxu0 0.0
    %548 = vmatpush2.msra.mxu0 0.0
    %549 = vmatprep.subr.mxu0 0.0
    %550 = vmatpush2.msra.mxu0 0.0
    %551 = vmatprep.subr.mxu0 0.0
    %552 = vmatpush2.msra.mxu0 0.0
    %553 = vmatprep.subr.mxu0 0.0
    %554 = vmatpush2.msra.mxu0 0.0
    %555 = vmatprep.subr.mxu0 0.0
    %556 = vmatpush2.msra.mxu0 0.0
    %557 = vmatprep.subr.mxu0 0.0
    %558 = vmatpush2.msra.mxu0 0.0
    %559 = vmatprep.subr.mxu0 0.0
    %560 = vmatpush2.msra.mxu0 0.0
    %561 = vmatprep.subr.mxu0 0.0
    %562 = vmatpush2.msra.mxu0 0.0
    %563 = vmatprep.mubr.f32.mxu0 0.0
    %564 = vmatmul.mubr.f32.gmra.mxu0 %v474
    %v565 = vpop.f32.mrf.mxu0
    %v566 = vadd.f32 %v497, %v565
    %v567 = vpop.f32.mrf.mxu0
    %568 = vmatprep.mubr.f32.mxu0 0.0
    %569 = vmatmul.mubr.f32.gmra.mxu0 %v475
    %v570 = vpop.f32.mrf.mxu0
    %v571 = vadd.f32 %v497, %v570
    %v572 = vpop.f32.mrf.mxu0
    %573 = vdwg.mxu0
    %v574 = vmax.f32 %v566, 0.0
    %v575 = vmax.f32 %v571, 0.0
    %576 = vst [vmem:[#allocation2] sm:$0xff] %v574
    %577 = vst [vmem:[#allocation2 + $0x8] sm:$0xff] %v575
    %v578 = vld [vmem:[#allocation17] sm:$0xff]
    %v579 = vld [vmem:[#allocation17 + $0x8] sm:$0xff]
    %v580 = vld [vmem:[#allocation17 + $0x10] sm:$0xff]
    %v581 = vld [vmem:[#allocation17 + $0x18] sm:$0xff]
    %v582 = vld [vmem:[#allocation17 + $0x20] sm:$0xff]
    %v583 = vld [vmem:[#allocation17 + $0x28] sm:$0xff]
    %v584 = vld [vmem:[#allocation17 + $0x30] sm:$0xff]
    %v585 = vld [vmem:[#allocation17 + $0x38] sm:$0xff]
    %v586 = vld [vmem:[#allocation17 + $0x40] sm:$0xff]
    %v587 = vld [vmem:[#allocation17 + $0x48] sm:$0xff]
    %v588 = vld [vmem:[#allocation17 + $0x50] sm:$0xff]
    %v589 = vld [vmem:[#allocation17 + $0x58] sm:$0xff]
    %v590 = vld [vmem:[#allocation17 + $0x60] sm:$0xff]
    %v591 = vld [vmem:[#allocation17 + $0x68] sm:$0xff]
    %v592 = vld [vmem:[#allocation17 + $0x70] sm:$0xff]
    %v593 = vld [vmem:[#allocation17 + $0x78] sm:$0xff]
    %v594 = vld [vmem:[%s11] sm:$0x1]
    %v595 = vld [vmem:[#allocation11] sm:$0xff]
    %v596 = vld [vmem:[#allocation11 + $0x8] sm:$0xff]
    %v597 = vld [vmem:[#allocation11 + $0x10] sm:$0xff]
    %v598 = vld [vmem:[#allocation11 + $0x18] sm:$0xff]
    %v599 = vld [vmem:[#allocation11 + $0x20] sm:$0xff]
    %v600 = vld [vmem:[#allocation11 + $0x28] sm:$0xff]
    %v602 = vlaneseq
    %v603 = vshrl.u32 %v602, 7
    %v604 = vsub.s32 0, %v603
    %v605 = vrot.slane %v594, %v604
    %607 = vmatprep.subr.mxu0 0.0
    %608 = vmatpush1.msra.mxu0 %v593
    %609 = vmatprep.subr.mxu0 0.0
    %610 = vmatpush1.msra.mxu0 %v592
    %611 = vmatprep.subr.mxu0 0.0
    %612 = vmatpush1.msra.mxu0 %v591
    %613 = vmatprep.subr.mxu0 0.0
    %614 = vmatpush1.msra.mxu0 %v590
    %615 = vmatprep.subr.mxu0 0.0
    %616 = vmatpush1.msra.mxu0 %v589
    %617 = vmatprep.subr.mxu0 0.0
    %618 = vmatpush1.msra.mxu0 %v588
    %619 = vmatprep.subr.mxu0 0.0
    %620 = vmatpush1.msra.mxu0 %v587
    %621 = vmatprep.subr.mxu0 0.0
    %622 = vmatpush1.msra.mxu0 %v586
    %623 = vmatprep.subr.mxu0 0.0
    %624 = vmatpush1.msra.mxu0 %v585
    %625 = vmatprep.subr.mxu0 0.0
    %626 = vmatpush1.msra.mxu0 %v584
    %627 = vmatprep.subr.mxu0 0.0
    %628 = vmatpush1.msra.mxu0 %v583
    %629 = vmatprep.subr.mxu0 0.0
    %630 = vmatpush1.msra.mxu0 %v582
    %631 = vmatprep.subr.mxu0 0.0
    %632 = vmatpush1.msra.mxu0 %v581
    %633 = vmatprep.subr.mxu0 0.0
    %634 = vmatpush1.msra.mxu0 %v580
    %635 = vmatprep.subr.mxu0 0.0
    %636 = vmatpush1.msra.mxu0 %v579
    %637 = vmatprep.subr.mxu0 0.0
    %638 = vmatpush1.msra.mxu0 %v578
    %639 = vmatprep.subr.mxu0 0.0
    %640 = vmatpush2.msra.mxu0 0.0
    %641 = vmatprep.subr.mxu0 0.0
    %642 = vmatpush2.msra.mxu0 0.0
    %643 = vmatprep.subr.mxu0 0.0
    %644 = vmatpush2.msra.mxu0 0.0
    %645 = vmatprep.subr.mxu0 0.0
    %646 = vmatpush2.msra.mxu0 0.0
    %647 = vmatprep.subr.mxu0 0.0
    %648 = vmatpush2.msra.mxu0 0.0
    %649 = vmatprep.subr.mxu0 0.0
    %650 = vmatpush2.msra.mxu0 0.0
    %651 = vmatprep.subr.mxu0 0.0
    %652 = vmatpush2.msra.mxu0 0.0
    %653 = vmatprep.subr.mxu0 0.0
    %654 = vmatpush2.msra.mxu0 0.0
    %655 = vmatprep.subr.mxu0 0.0
    %656 = vmatpush2.msra.mxu0 0.0
    %657 = vmatprep.subr.mxu0 0.0
    %658 = vmatpush2.msra.mxu0 0.0
    %659 = vmatprep.subr.mxu0 0.0
    %660 = vmatpush2.msra.mxu0 0.0
    %661 = vmatprep.subr.mxu0 0.0
    %662 = vmatpush2.msra.mxu0 0.0
    %663 = vmatprep.subr.mxu0 0.0
    %664 = vmatpush2.msra.mxu0 0.0
    %665 = vmatprep.subr.mxu0 0.0
    %666 = vmatpush2.msra.mxu0 0.0
    %667 = vmatprep.subr.mxu0 0.0
    %668 = vmatpush2.msra.mxu0 0.0
    %669 = vmatprep.subr.mxu0 0.0
    %670 = vmatpush2.msra.mxu0 0.0
    %671 = vmatprep.mubr.f32.mxu0 0.0
    %672 = vmatmul.mubr.f32.gmra.mxu0 %v595
    %v673 = vpop.f32.mrf.mxu0
    %v674 = vadd.f32 %v605, %v673
    %v675 = vpop.f32.mrf.mxu0
    %676 = vmatprep.mubr.f32.mxu0 0.0
    %677 = vmatmul.mubr.f32.gmra.mxu0 %v596
    %v678 = vpop.f32.mrf.mxu0
    %v679 = vadd.f32 %v605, %v678
    %v680 = vpop.f32.mrf.mxu0
    %681 = vmatprep.mubr.f32.mxu0 0.0
    %682 = vmatmul.mubr.f32.gmra.mxu0 %v597
    %v683 = vpop.f32.mrf.mxu0
    %v684 = vadd.f32 %v605, %v683
    %v685 = vpop.f32.mrf.mxu0
    %686 = vmatprep.mubr.f32.mxu0 0.0
    %687 = vmatmul.mubr.f32.gmra.mxu0 %v598
    %v688 = vpop.f32.mrf.mxu0
    %v689 = vadd.f32 %v605, %v688
    %v690 = vpop.f32.mrf.mxu0
    %691 = vmatprep.mubr.f32.mxu0 0.0
    %692 = vmatmul.mubr.f32.gmra.mxu0 %v599
    %v693 = vpop.f32.mrf.mxu0
    %v694 = vadd.f32 %v605, %v693
    %v695 = vpop.f32.mrf.mxu0
    %696 = vmatprep.mubr.f32.mxu0 0.0
    %697 = vmatmul.mubr.f32.gmra.mxu0 %v600
    %v698 = vpop.f32.mrf.mxu0
    %v699 = vadd.f32 %v605, %v698
    %v700 = vpop.f32.mrf.mxu0
    %701 = vdwg.mxu0
    loop: start=0, step=1, limit=48
    $region116: #{tpu_custom_call.1} parent=1 // loop_pre_header
      _
    $region117: #{tpu_custom_call.1} parent=1 // loop_header
      %s703 = sphi 0, %s707
      %p704 = scmp.ge.s32.totalorder %s703, 48
    $region118: #{tpu_custom_call.1} parent=1 // loop_header_branch
      %706 = sbr.rel (%p704) target = $region122
    $region119: #{tpu_custom_call.1} parent=1 // loop_body
      %s708 = sld [smem:[#allocation6 + %s703]]
      %s709 = scalar_lea.vmem [#allocation2], %s708
      %v710 = vld [vmem:[%s709] sm:$0x1]
      %s711 = scalar_lea.vmem [#allocation3], %s703
      %712 = vst [vmem:[%s711] sm:$0x1] %v710
    $region120: #{tpu_custom_call.1} parent=1 // loop_footer
      %s707 = sadd.s32 1, %s703
    $region121: #{tpu_custom_call.1} parent=1 // loop_footer_branch
      %702 = sbr.rel target = $region117
    $region122: #{tpu_custom_call.1} parent=1 // loop_exit
      _
    %v713 = vld [vmem:[#allocation3] sm:$0xff]
    %v714 = vld [vmem:[#allocation3 + $0x8] sm:$0xff]
    %v715 = vld [vmem:[#allocation3 + $0x10] sm:$0xff]
    %v716 = vld [vmem:[#allocation3 + $0x18] sm:$0xff]
    %v717 = vld [vmem:[#allocation3 + $0x20] sm:$0xff]
    %v718 = vld [vmem:[#allocation3 + $0x28] sm:$0xff]
    %v719 = vadd.f32 %v713, %v674
    %v720 = vadd.f32 %v714, %v679
    %v721 = vadd.f32 %v715, %v684
    %v722 = vadd.f32 %v716, %v689
    %v723 = vadd.f32 %v717, %v694
    %v724 = vadd.f32 %v718, %v699
    %v725 = vmax.f32 %v719, 0.0
    %v726 = vmax.f32 %v720, 0.0
    %v727 = vmax.f32 %v721, 0.0
    %v728 = vmax.f32 %v722, 0.0
    %v729 = vmax.f32 %v723, 0.0
    %v730 = vmax.f32 %v724, 0.0
    %731 = vst [vmem:[#allocation3] sm:$0xff] %v725
    %732 = vst [vmem:[#allocation3 + $0x8] sm:$0xff] %v726
    %733 = vst [vmem:[#allocation3 + $0x10] sm:$0xff] %v727
    %734 = vst [vmem:[#allocation3 + $0x18] sm:$0xff] %v728
    %735 = vst [vmem:[#allocation3 + $0x20] sm:$0xff] %v729
    %736 = vst [vmem:[#allocation3 + $0x28] sm:$0xff] %v730
    %737 = vst [vmem:[#allocation4] sm:$0xff] 0.0
    %738 = vst [vmem:[#allocation4 + $0x8] sm:$0xff] 0.0
    loop: start=0, step=1, limit=48
    $region123: #{tpu_custom_call.1} parent=1 // loop_pre_header
      _
    $region124: #{tpu_custom_call.1} parent=1 // loop_header
      %s740 = sphi 0, %s744
      %p741 = scmp.ge.s32.totalorder %s740, 48
    $region125: #{tpu_custom_call.1} parent=1 // loop_header_branch
      %743 = sbr.rel (%p741) target = $region129
    $region126: #{tpu_custom_call.1} parent=1 // loop_body
      %s745 = sld [smem:[#allocation7 + %s740]]
      %s746 = scalar_lea.vmem [#allocation4], %s745
      %v747 = vld [vmem:[%s746] sm:$0x1]
      %s748 = scalar_lea.vmem [#allocation3], %s740
      %v749 = vld [vmem:[%s748] sm:$0x1]
      %v750 = vadd.f32 %v747, %v749
      %751 = vst [vmem:[%s746] sm:$0x1] %v750
    $region127: #{tpu_custom_call.1} parent=1 // loop_footer
      %s744 = sadd.s32 1, %s740
    $region128: #{tpu_custom_call.1} parent=1 // loop_footer_branch
      %739 = sbr.rel target = $region124
    $region129: #{tpu_custom_call.1} parent=1 // loop_exit
      _
    %v752 = vld [vmem:[#allocation2] sm:$0xff]
    %v753 = vld [vmem:[#allocation2 + $0x8] sm:$0xff]
    %v754 = vld [vmem:[#allocation4] sm:$0xff]
    %v755 = vld [vmem:[#allocation4 + $0x8] sm:$0xff]
    %v756 = vadd.f32 %v752, %v754
    %v757 = vadd.f32 %v753, %v755
    %v758 = vld [vmem:[#allocation19] sm:$0xff]
    %v759 = vld [vmem:[#allocation19 + $0x8] sm:$0xff]
    %v760 = vld [vmem:[#allocation19 + $0x10] sm:$0xff]
    %v761 = vld [vmem:[#allocation19 + $0x18] sm:$0xff]
    %v762 = vld [vmem:[#allocation19 + $0x20] sm:$0xff]
    %v763 = vld [vmem:[#allocation19 + $0x28] sm:$0xff]
    %v764 = vld [vmem:[#allocation19 + $0x30] sm:$0xff]
    %v765 = vld [vmem:[#allocation19 + $0x38] sm:$0xff]
    %v766 = vld [vmem:[#allocation19 + $0x40] sm:$0xff]
    %v767 = vld [vmem:[#allocation19 + $0x48] sm:$0xff]
    %v768 = vld [vmem:[#allocation19 + $0x50] sm:$0xff]
    %v769 = vld [vmem:[#allocation19 + $0x58] sm:$0xff]
    %v770 = vld [vmem:[#allocation19 + $0x60] sm:$0xff]
    %v771 = vld [vmem:[#allocation19 + $0x68] sm:$0xff]
    %v772 = vld [vmem:[#allocation19 + $0x70] sm:$0xff]
    %v773 = vld [vmem:[#allocation19 + $0x78] sm:$0xff]
    %v774 = vld [vmem:[%s13] sm:$0x1]
    %v776 = vlaneseq
    %v777 = vshrl.u32 %v776, 7
    %v778 = vsub.s32 0, %v777
    %v779 = vrot.slane %v774, %v778
    %781 = vmatprep.subr.mxu0 0.0
    %782 = vmatpush1.msra.mxu0 %v773
    %783 = vmatprep.subr.mxu0 0.0
    %784 = vmatpush1.msra.mxu0 %v772
    %785 = vmatprep.subr.mxu0 0.0
    %786 = vmatpush1.msra.mxu0 %v771
    %787 = vmatprep.subr.mxu0 0.0
    %788 = vmatpush1.msra.mxu0 %v770
    %789 = vmatprep.subr.mxu0 0.0
    %790 = vmatpush1.msra.mxu0 %v769
    %791 = vmatprep.subr.mxu0 0.0
    %792 = vmatpush1.msra.mxu0 %v768
    %793 = vmatprep.subr.mxu0 0.0
    %794 = vmatpush1.msra.mxu0 %v767
    %795 = vmatprep.subr.mxu0 0.0
    %796 = vmatpush1.msra.mxu0 %v766
    %797 = vmatprep.subr.mxu0 0.0
    %798 = vmatpush1.msra.mxu0 %v765
    %799 = vmatprep.subr.mxu0 0.0
    %800 = vmatpush1.msra.mxu0 %v764
    %801 = vmatprep.subr.mxu0 0.0
    %802 = vmatpush1.msra.mxu0 %v763
    %803 = vmatprep.subr.mxu0 0.0
    %804 = vmatpush1.msra.mxu0 %v762
    %805 = vmatprep.subr.mxu0 0.0
    %806 = vmatpush1.msra.mxu0 %v761
    %807 = vmatprep.subr.mxu0 0.0
    %808 = vmatpush1.msra.mxu0 %v760
    %809 = vmatprep.subr.mxu0 0.0
    %810 = vmatpush1.msra.mxu0 %v759
    %811 = vmatprep.subr.mxu0 0.0
    %812 = vmatpush1.msra.mxu0 %v758
    %813 = vmatprep.subr.mxu0 0.0
    %814 = vmatpush2.msra.mxu0 0.0
    %815 = vmatprep.subr.mxu0 0.0
    %816 = vmatpush2.msra.mxu0 0.0
    %817 = vmatprep.subr.mxu0 0.0
    %818 = vmatpush2.msra.mxu0 0.0
    %819 = vmatprep.subr.mxu0 0.0
    %820 = vmatpush2.msra.mxu0 0.0
    %821 = vmatprep.subr.mxu0 0.0
    %822 = vmatpush2.msra.mxu0 0.0
    %823 = vmatprep.subr.mxu0 0.0
    %824 = vmatpush2.msra.mxu0 0.0
    %825 = vmatprep.subr.mxu0 0.0
    %826 = vmatpush2.msra.mxu0 0.0
    %827 = vmatprep.subr.mxu0 0.0
    %828 = vmatpush2.msra.mxu0 0.0
    %829 = vmatprep.subr.mxu0 0.0
    %830 = vmatpush2.msra.mxu0 0.0
    %831 = vmatprep.subr.mxu0 0.0
    %832 = vmatpush2.msra.mxu0 0.0
    %833 = vmatprep.subr.mxu0 0.0
    %834 = vmatpush2.msra.mxu0 0.0
    %835 = vmatprep.subr.mxu0 0.0
    %836 = vmatpush2.msra.mxu0 0.0
    %837 = vmatprep.subr.mxu0 0.0
    %838 = vmatpush2.msra.mxu0 0.0
    %839 = vmatprep.subr.mxu0 0.0
    %840 = vmatpush2.msra.mxu0 0.0
    %841 = vmatprep.subr.mxu0 0.0
    %842 = vmatpush2.msra.mxu0 0.0
    %843 = vmatprep.subr.mxu0 0.0
    %844 = vmatpush2.msra.mxu0 0.0
    %845 = vmatprep.mubr.f32.mxu0 0.0
    %846 = vmatmul.mubr.f32.gmra.mxu0 %v756
    %v847 = vpop.f32.mrf.mxu0
    %v848 = vadd.f32 %v779, %v847
    %v849 = vpop.f32.mrf.mxu0
    %850 = vmatprep.mubr.f32.mxu0 0.0
    %851 = vmatmul.mubr.f32.gmra.mxu0 %v757
    %v852 = vpop.f32.mrf.mxu0
    %v853 = vadd.f32 %v779, %v852
    %v854 = vpop.f32.mrf.mxu0
    %855 = vdwg.mxu0
    %v856 = vmax.f32 %v848, 0.0
    %v857 = vmax.f32 %v853, 0.0
    %v858 = vld [vmem:[#allocation20] sm:$0xff]
    %v859 = vld [vmem:[#allocation20 + $0x8] sm:$0xff]
    %v860 = vld [vmem:[#allocation20 + $0x10] sm:$0xff]
    %v861 = vld [vmem:[#allocation20 + $0x18] sm:$0xff]
    %v862 = vld [vmem:[#allocation20 + $0x20] sm:$0xff]
    %v863 = vld [vmem:[#allocation20 + $0x28] sm:$0xff]
    %v864 = vld [vmem:[#allocation20 + $0x30] sm:$0xff]
    %v865 = vld [vmem:[#allocation20 + $0x38] sm:$0xff]
    %v866 = vld [vmem:[#allocation20 + $0x40] sm:$0xff]
    %v867 = vld [vmem:[#allocation20 + $0x48] sm:$0xff]
    %v868 = vld [vmem:[#allocation20 + $0x50] sm:$0xff]
    %v869 = vld [vmem:[#allocation20 + $0x58] sm:$0xff]
    %v870 = vld [vmem:[#allocation20 + $0x60] sm:$0xff]
    %v871 = vld [vmem:[#allocation20 + $0x68] sm:$0xff]
    %v872 = vld [vmem:[#allocation20 + $0x70] sm:$0xff]
    %v873 = vld [vmem:[#allocation20 + $0x78] sm:$0xff]
    %v874 = vld [vmem:[%s15] sm:$0x1]
    %v876 = vlaneseq
    %v877 = vshrl.u32 %v876, 7
    %v878 = vsub.s32 0, %v877
    %v879 = vrot.slane %v874, %v878
    %881 = vmatprep.subr.mxu0 0.0
    %882 = vmatpush1.msra.mxu0 %v873
    %883 = vmatprep.subr.mxu0 0.0
    %884 = vmatpush1.msra.mxu0 %v872
    %885 = vmatprep.subr.mxu0 0.0
    %886 = vmatpush1.msra.mxu0 %v871
    %887 = vmatprep.subr.mxu0 0.0
    %888 = vmatpush1.msra.mxu0 %v870
    %889 = vmatprep.subr.mxu0 0.0
    %890 = vmatpush1.msra.mxu0 %v869
    %891 = vmatprep.subr.mxu0 0.0
    %892 = vmatpush1.msra.mxu0 %v868
    %893 = vmatprep.subr.mxu0 0.0
    %894 = vmatpush1.msra.mxu0 %v867
    %895 = vmatprep.subr.mxu0 0.0
    %896 = vmatpush1.msra.mxu0 %v866
    %897 = vmatprep.subr.mxu0 0.0
    %898 = vmatpush1.msra.mxu0 %v865
    %899 = vmatprep.subr.mxu0 0.0
    %900 = vmatpush1.msra.mxu0 %v864
    %901 = vmatprep.subr.mxu0 0.0
    %902 = vmatpush1.msra.mxu0 %v863
    %903 = vmatprep.subr.mxu0 0.0
    %904 = vmatpush1.msra.mxu0 %v862
    %905 = vmatprep.subr.mxu0 0.0
    %906 = vmatpush1.msra.mxu0 %v861
    %907 = vmatprep.subr.mxu0 0.0
    %908 = vmatpush1.msra.mxu0 %v860
    %909 = vmatprep.subr.mxu0 0.0
    %910 = vmatpush1.msra.mxu0 %v859
    %911 = vmatprep.subr.mxu0 0.0
    %912 = vmatpush1.msra.mxu0 %v858
    %913 = vmatprep.subr.mxu0 0.0
    %914 = vmatpush2.msra.mxu0 0.0
    %915 = vmatprep.subr.mxu0 0.0
    %916 = vmatpush2.msra.mxu0 0.0
    %917 = vmatprep.subr.mxu0 0.0
    %918 = vmatpush2.msra.mxu0 0.0
    %919 = vmatprep.subr.mxu0 0.0
    %920 = vmatpush2.msra.mxu0 0.0
    %921 = vmatprep.subr.mxu0 0.0
    %922 = vmatpush2.msra.mxu0 0.0
    %923 = vmatprep.subr.mxu0 0.0
    %924 = vmatpush2.msra.mxu0 0.0
    %925 = vmatprep.subr.mxu0 0.0
    %926 = vmatpush2.msra.mxu0 0.0
    %927 = vmatprep.subr.mxu0 0.0
    %928 = vmatpush2.msra.mxu0 0.0
    %929 = vmatprep.subr.mxu0 0.0
    %930 = vmatpush2.msra.mxu0 0.0
    %931 = vmatprep.subr.mxu0 0.0
    %932 = vmatpush2.msra.mxu0 0.0
    %933 = vmatprep.subr.mxu0 0.0
    %934 = vmatpush2.msra.mxu0 0.0
    %935 = vmatprep.subr.mxu0 0.0
    %936 = vmatpush2.msra.mxu0 0.0
    %937 = vmatprep.subr.mxu0 0.0
    %938 = vmatpush2.msra.mxu0 0.0
    %939 = vmatprep.subr.mxu0 0.0
    %940 = vmatpush2.msra.mxu0 0.0
    %941 = vmatprep.subr.mxu0 0.0
    %942 = vmatpush2.msra.mxu0 0.0
    %943 = vmatprep.subr.mxu0 0.0
    %944 = vmatpush2.msra.mxu0 0.0
    %945 = vmatprep.mubr.f32.mxu0 0.0
    %946 = vmatmul.mubr.f32.gmra.mxu0 %v856
    %v947 = vpop.f32.mrf.mxu0
    %v948 = vadd.f32 %v879, %v947
    %v949 = vpop.f32.mrf.mxu0
    %950 = vmatprep.mubr.f32.mxu0 0.0
    %951 = vmatmul.mubr.f32.gmra.mxu0 %v857
    %v952 = vpop.f32.mrf.mxu0
    %v953 = vadd.f32 %v879, %v952
    %v954 = vpop.f32.mrf.mxu0
    %955 = vdwg.mxu0
    %v956 = vmax.f32 %v948, 0.0
    %v957 = vmax.f32 %v953, 0.0
    %958 = vst [vmem:[#allocation2] sm:$0xff] %v956
    %959 = vst [vmem:[#allocation2 + $0x8] sm:$0xff] %v957
    %v960 = vld [vmem:[#allocation22] sm:$0xff]
    %v961 = vld [vmem:[#allocation22 + $0x8] sm:$0xff]
    %v962 = vld [vmem:[#allocation22 + $0x10] sm:$0xff]
    %v963 = vld [vmem:[#allocation22 + $0x18] sm:$0xff]
    %v964 = vld [vmem:[#allocation22 + $0x20] sm:$0xff]
    %v965 = vld [vmem:[#allocation22 + $0x28] sm:$0xff]
    %v966 = vld [vmem:[#allocation22 + $0x30] sm:$0xff]
    %v967 = vld [vmem:[#allocation22 + $0x38] sm:$0xff]
    %v968 = vld [vmem:[#allocation22 + $0x40] sm:$0xff]
    %v969 = vld [vmem:[#allocation22 + $0x48] sm:$0xff]
    %v970 = vld [vmem:[#allocation22 + $0x50] sm:$0xff]
    %v971 = vld [vmem:[#allocation22 + $0x58] sm:$0xff]
    %v972 = vld [vmem:[#allocation22 + $0x60] sm:$0xff]
    %v973 = vld [vmem:[#allocation22 + $0x68] sm:$0xff]
    %v974 = vld [vmem:[#allocation22 + $0x70] sm:$0xff]
    %v975 = vld [vmem:[#allocation22 + $0x78] sm:$0xff]
    %v976 = vld [vmem:[%s17] sm:$0x1]
    %v977 = vld [vmem:[#allocation2] sm:$0xff]
    %v978 = vld [vmem:[#allocation2 + $0x8] sm:$0xff]
    %v980 = vlaneseq
    %v981 = vshrl.u32 %v980, 7
    %v982 = vsub.s32 0, %v981
    %v983 = vrot.slane %v976, %v982
    %985 = vmatprep.subr.mxu0 0.0
    %986 = vmatpush1.msra.mxu0 %v975
    %987 = vmatprep.subr.mxu0 0.0
    %988 = vmatpush1.msra.mxu0 %v974
    %989 = vmatprep.subr.mxu0 0.0
    %990 = vmatpush1.msra.mxu0 %v973
    %991 = vmatprep.subr.mxu0 0.0
    %992 = vmatpush1.msra.mxu0 %v972
    %993 = vmatprep.subr.mxu0 0.0
    %994 = vmatpush1.msra.mxu0 %v971
    %995 = vmatprep.subr.mxu0 0.0
    %996 = vmatpush1.msra.mxu0 %v970
    %997 = vmatprep.subr.mxu0 0.0
    %998 = vmatpush1.msra.mxu0 %v969
    %999 = vmatprep.subr.mxu0 0.0
    %1000 = vmatpush1.msra.mxu0 %v968
    %1001 = vmatprep.subr.mxu0 0.0
    %1002 = vmatpush1.msra.mxu0 %v967
    %1003 = vmatprep.subr.mxu0 0.0
    %1004 = vmatpush1.msra.mxu0 %v966
    %1005 = vmatprep.subr.mxu0 0.0
    %1006 = vmatpush1.msra.mxu0 %v965
    %1007 = vmatprep.subr.mxu0 0.0
    %1008 = vmatpush1.msra.mxu0 %v964
    %1009 = vmatprep.subr.mxu0 0.0
    %1010 = vmatpush1.msra.mxu0 %v963
    %1011 = vmatprep.subr.mxu0 0.0
    %1012 = vmatpush1.msra.mxu0 %v962
    %1013 = vmatprep.subr.mxu0 0.0
    %1014 = vmatpush1.msra.mxu0 %v961
    %1015 = vmatprep.subr.mxu0 0.0
    %1016 = vmatpush1.msra.mxu0 %v960
    %1017 = vmatprep.subr.mxu0 0.0
    %1018 = vmatpush2.msra.mxu0 0.0
    %1019 = vmatprep.subr.mxu0 0.0
    %1020 = vmatpush2.msra.mxu0 0.0
    %1021 = vmatprep.subr.mxu0 0.0
    %1022 = vmatpush2.msra.mxu0 0.0
    %1023 = vmatprep.subr.mxu0 0.0
    %1024 = vmatpush2.msra.mxu0 0.0
    %1025 = vmatprep.subr.mxu0 0.0
    %1026 = vmatpush2.msra.mxu0 0.0
    %1027 = vmatprep.subr.mxu0 0.0
    %1028 = vmatpush2.msra.mxu0 0.0
    %1029 = vmatprep.subr.mxu0 0.0
    %1030 = vmatpush2.msra.mxu0 0.0
    %1031 = vmatprep.subr.mxu0 0.0
    %1032 = vmatpush2.msra.mxu0 0.0
    %1033 = vmatprep.subr.mxu0 0.0
    %1034 = vmatpush2.msra.mxu0 0.0
    %1035 = vmatprep.subr.mxu0 0.0
    %1036 = vmatpush2.msra.mxu0 0.0
    %1037 = vmatprep.subr.mxu0 0.0
    %1038 = vmatpush2.msra.mxu0 0.0
    %1039 = vmatprep.subr.mxu0 0.0
    %1040 = vmatpush2.msra.mxu0 0.0
    %1041 = vmatprep.subr.mxu0 0.0
    %1042 = vmatpush2.msra.mxu0 0.0
    %1043 = vmatprep.subr.mxu0 0.0
    %1044 = vmatpush2.msra.mxu0 0.0
    %1045 = vmatprep.subr.mxu0 0.0
    %1046 = vmatpush2.msra.mxu0 0.0
    %1047 = vmatprep.subr.mxu0 0.0
    %1048 = vmatpush2.msra.mxu0 0.0
    %1049 = vmatprep.mubr.f32.mxu0 0.0
    %1050 = vmatmul.mubr.f32.gmra.mxu0 %v977
    %v1051 = vpop.f32.mrf.mxu0
    %v1052 = vadd.f32 %v983, %v1051
    %v1053 = vpop.f32.mrf.mxu0
    %1054 = vmatprep.mubr.f32.mxu0 0.0
    %1055 = vmatmul.mubr.f32.gmra.mxu0 %v978
    %v1056 = vpop.f32.mrf.mxu0
    %v1057 = vadd.f32 %v983, %v1056
    %v1058 = vpop.f32.mrf.mxu0
    %1059 = vdwg.mxu0
    %v1060 = vtanh.pop %v1052
    %v1061 = vtanh.pop %v1057
    %1062 = vst [vmem:[#allocation23] sm:$0xff] %v1060
    %1063 = vst [vmem:[#allocation23 + $0x8] sm:$0xff] %v1061
    // Predicated region
    $region130: #{tpu_custom_call.1} parent=1 // pred_check
      _
    $region131: #{tpu_custom_call.1} parent=1 // pred_check_branch
      %1065 = sbr.rel (0) target = $region133
    $region132: #{tpu_custom_call.1} parent=1 // pred_region
      %s1067 = ssub.s32 256, 256
      %1068 = vsyncadd [#allocation10], %s1067
      %s1069 = sshll.u32 [#allocation23], 4
      %s1070 = int_to_ptr.vmem [resolvable:$true] %s1069
      %1075 = dma.vmem_to_hbm [thread:$0]  %s1070, 256, %s18, [#allocation10], 128, 128, 8
    $region133: #{tpu_custom_call.1} parent=1 // pred_fallthru
      _
    // Predicated region
    $region134: #{tpu_custom_call.1} parent=1 // pred_check
      _
    $region135: #{tpu_custom_call.1} parent=1 // pred_check_branch
      %1077 = sbr.rel (0) target = $region137
    $region136: #{tpu_custom_call.1} parent=1 // pred_region
      %1078 = dma.done [#allocation10], 256
    $region137: #{tpu_custom_call.1} parent=1 // pred_fallthru
      _
    %1079 = vsyncpa [#allocation9], 1
    %1080 = vsyncpa [#allocation12], 1
    %1081 = vsyncpa [#allocation15], 1
    %1082 = vsyncpa [#allocation18], 1
    %1083 = vsyncpa [#allocation21], 1
    %1084 = vsyncpa [#allocation10], 1

</llo_original>
